<compile_context>
chip_gen: v5e
topology: v5e:2x2
jax: 0.10.0
libtpu: 0.0.40
codegen_flags: <defaults>
</compile_context>

<pallas_src>
import numpy as np

import jax
import jax.numpy as jnp
from jax.experimental import pallas as pl
from jax.experimental.pallas import tpu as pltpu

H = W = 8
P = H * W            # 64 spatial positions (fc expects 32*8*8 => input must be 8x8)
C_IN, C1, C2, N_OUT = 3, 16, 32, 10


# ------------------------------ fused kernel ------------------------------- #

def _fused_forward_kernel(x_ref, sh_ref, wr1_ref, b1_ref, wr2_ref, b2_ref,
                          wfch_ref, sel_ref, bfc_ref, o_ref):
    """Everything is a 2-D matmul.

    x_ref   : (R, 8*3)      rows = (b, h), lanes = (w, cin)
    sh_ref  : (2, R, R)     row-shift+border-mask matrices for dy = 0 and dy = 2
    wr*_ref : (3, 8*Cin, 8*Cout)  banded block-Toeplitz conv weights (one per dy)
    b*_ref  : (1, 8*Cout)   conv bias tiled over w
    wfch_ref: (8, 8*32, 10) fc weight pre-permuted per image row h
    sel_ref : (8, TB, R)    row-selection matrices (pick row b*8+h of each image)
    bfc_ref : (1, 10)
    o_ref   : (TB, 10)
    """
    f32 = jnp.float32
    sh_up = sh_ref[0]          # picks input row h-1 of the same image (else 0)
    sh_dn = sh_ref[1]          # picks input row h+1 of the same image (else 0)

    def conv3x3(act, wr_ref, bias_ref):
        # dy = 1 (same row): no shift needed.
        out = jnp.dot(act, wr_ref[1], preferred_element_type=f32)
        # dy = 0 / dy = 2: banded shift matmul (also zeroes out-of-image rows).
        up = jnp.dot(sh_up, act, preferred_element_type=f32)
        out = out + jnp.dot(up, wr_ref[0], preferred_element_type=f32)
        dn = jnp.dot(sh_dn, act, preferred_element_type=f32)
        out = out + jnp.dot(dn, wr_ref[2], preferred_element_type=f32)
        return out + bias_ref[...]

    a1 = conv3x3(x_ref[...], wr1_ref, b1_ref)     # (R, 8*16)
    a2 = conv3x3(a1, wr2_ref, b2_ref)              # (R, 8*32)

    # Flatten (torch C,H,W order) + fc: for each image row h, select row b*8+h of
    # every image and contract against the pre-permuted per-h fc weight slab.
    res = jnp.zeros(o_ref.shape, f32)
    for h in range(8):
        picked = jnp.dot(sel_ref[h], a2, preferred_element_type=f32)      # (TB, 256)
        res = res + jnp.dot(picked, wfch_ref[h], preferred_element_type=f32)
    o_ref[...] = (res + bfc_ref[...]).astype(o_ref.dtype)


# --------------------------- one-time weight prep --------------------------- #

def init_torch_params(key):
    """Parameters in PyTorch's native layouts (what state_dict would hold)."""
    ks = jax.random.split(key, 6)
    s = 0.1
    return {
        "conv1_w": s * jax.random.normal(ks[0], (C1, C_IN, 3, 3), jnp.float32),
        "conv1_b": s * jax.random.normal(ks[1], (C1,), jnp.float32),
        "conv2_w": s * jax.random.normal(ks[2], (C2, C1, 3, 3), jnp.float32),
        "conv2_b": s * jax.random.normal(ks[3], (C2,), jnp.float32),
        "fc1_w":   s * jax.random.normal(ks[4], (N_OUT, C2 * H * W), jnp.float32),
        "fc1_b":   s * jax.random.normal(ks[5], (N_OUT,), jnp.float32),
    }


def _build_wrow(conv_w):
    """(Cout,Cin,3,3) -> (3, 8*Cin, 8*Cout): per-dy banded block-Toeplitz matrix
    that performs the w-direction of the conv (zero padding included)."""
    k = np.asarray(conv_w, np.float32)
    cout, cin = k.shape[0], k.shape[1]
    wr = np.zeros((3, W * cin, W * cout), np.float32)
    for dy in range(3):
        for w in range(W):
            for dx in range(3):
                w_in = w + dx - 1
                if 0 <= w_in < W:
                    wr[dy, w_in * cin:(w_in + 1) * cin,
                       w * cout:(w + 1) * cout] = k[:, :, dy, dx].T
    return jnp.asarray(wr)


def _build_shift(rows):
    """(2, R, R): out[k] @ act picks input row r + dy - 1 (dy = 0, 2) of the same
    image, zero at image borders — i.e. the h-shift plus its border mask."""
    sh = np.zeros((2, rows, rows), np.float32)
    for k, dy in enumerate((0, 2)):
        for r in range(rows):
            r_in = r + dy - 1
            if 0 <= r_in < rows and (r_in // H) == (r // H):
                sh[k, r, r_in] = 1.0
    return jnp.asarray(sh)


def _build_sel(tb):
    """(8, TB, TB*8): sel[h] @ a2 extracts row b*8+h of every image in the tile."""
    sel = np.zeros((H, tb, tb * H), np.float32)
    for h in range(H):
        for b in range(tb):
            sel[h, b, b * H + h] = 1.0
    return jnp.asarray(sel)


def _build_wfch(fc_w):
    """(10, 2048) torch fc weight -> (8, 8*32, 10): per-h slab with rows ordered
    (w, c) to match the kernel's lane order (folds the torch C,H,W flatten)."""
    arr = np.asarray(fc_w, np.float32).reshape(N_OUT, C2, H, W)      # (o, c, h, w)
    return jnp.asarray(np.transpose(arr, (2, 3, 1, 0)).reshape(H, W * C2, N_OUT))


def prepare_kernel_params(tp):
    """One-time layout conversion; the kernel then does matmuls only."""
    return {
        "wr1": _build_wrow(tp["conv1_w"]),
        "b1":  jnp.asarray(np.tile(np.asarray(tp["conv1_b"], np.float32), W).reshape(1, -1)),
        "wr2": _build_wrow(tp["conv2_w"]),
        "b2":  jnp.asarray(np.tile(np.asarray(tp["conv2_b"], np.float32), W).reshape(1, -1)),
        "wfch": _build_wfch(tp["fc1_w"]),
        "bfc": jnp.asarray(np.asarray(tp["fc1_b"], np.float32).reshape(1, -1)),
    }


# ------------------------------ host wrapper -------------------------------- #

@jax.jit
def simple_model_forward(x_nchw, kp):
    """x_nchw: (B, 3, 8, 8) f32 -> (B, 10) f32."""
    B = x_nchw.shape[0]
    # Batch tile: whole batch when small, 32 images (256 rows) per grid step
    # otherwise (conservative for v7x's 64 MiB VMEM; v5e/v6e could go larger).
    TB = B if B <= 32 else 32
    assert B % TB == 0, "TODO(synk): ragged batch needs a padded last tile"
    n_tiles = B // TB
    R = TB * H

    # (B,3,8,8) -> rows (b,h), lanes (w,c).  Single tiny XLA transpose.
    x_k = jnp.transpose(x_nchw, (0, 2, 3, 1)).reshape(B * H, W * C_IN).astype(jnp.float32)

    sh = _build_shift(R)        # trace-time constants (depend only on tile size)
    sel = _build_sel(TB)

    flops = 2 * B * P * (9 * C_IN * C1 + 9 * C1 * C2) + 2 * B * (C2 * P) * N_OUT
    bytes_accessed = int(
        B * P * C_IN * 4
        + sum(int(v.size) * 4 for v in kp.values())
        + int(sh.size) * 4 + int(sel.size) * 4
        + B * N_OUT * 4)

    return pl.pallas_call(
        _fused_forward_kernel,
        out_shape=jax.ShapeDtypeStruct((B, N_OUT), jnp.float32),
        grid=(n_tiles,),
        in_specs=[
            pl.BlockSpec((R, W * C_IN), lambda i: (i, 0)),          # x tile
            pl.BlockSpec(sh.shape, lambda i: (0, 0, 0)),            # resident
            pl.BlockSpec(kp["wr1"].shape, lambda i: (0, 0, 0)),     # resident
            pl.BlockSpec(kp["b1"].shape, lambda i: (0, 0)),
            pl.BlockSpec(kp["wr2"].shape, lambda i: (0, 0, 0)),
            pl.BlockSpec(kp["b2"].shape, lambda i: (0, 0)),
            pl.BlockSpec(kp["wfch"].shape, lambda i: (0, 0, 0)),
            pl.BlockSpec(sel.shape, lambda i: (0, 0, 0)),
            pl.BlockSpec(kp["bfc"].shape, lambda i: (0, 0)),
        ],
        out_specs=pl.BlockSpec((TB, N_OUT), lambda i: (i, 0)),
        compiler_params=pltpu.CompilerParams(
            dimension_semantics=("parallel",)),
        cost_estimate=pl.CostEstimate(
            flops=flops, transcendentals=0, bytes_accessed=bytes_accessed),
    )(x_k, sh, kp["wr1"], kp["b1"], kp["wr2"], kp["b2"],
      kp["wfch"], sel, kp["bfc"])


def reference_forward(x_nchw, tp):
    """Pure-JAX reference with PyTorch semantics (for correctness check)."""
    def conv(x, w, b):
        y = jax.lax.conv_general_dilated(
            x, w, window_strides=(1, 1), padding=((1, 1), (1, 1)),
            dimension_numbers=("NCHW", "OIHW", "NCHW"),
            precision=jax.lax.Precision.HIGHEST)
        return y + b.reshape(1, -1, 1, 1)
    y = conv(x_nchw, tp["conv1_w"], tp["conv1_b"])
    y = conv(y, tp["conv2_w"], tp["conv2_b"])
    y = y.reshape(y.shape[0], -1)
    return jnp.dot(y, tp["fc1_w"].T, precision=jax.lax.Precision.HIGHEST) + tp["fc1_b"]


if __name__ == "__main__":
    key = jax.random.PRNGKey(0)
    k_x, k_params = jax.random.split(key)

    torch_params = init_torch_params(k_params)
    kparams = prepare_kernel_params(torch_params)

    # fc1 expects 32*8*8 features with no pooling => input spatial must be 8x8.
    x = jax.random.normal(k_x, (2, 3, 8, 8), jnp.float32)

    out = jax.block_until_ready(simple_model_forward(x, kparams))
    assert out.shape == (2, 10), out.shape
    assert out.dtype == jnp.float32, out.dtype

    ref = jax.block_until_ready(reference_forward(x, torch_params))
    max_err = float(jnp.max(jnp.abs(out - ref)))
    assert jnp.allclose(out, ref, atol=5e-2, rtol=5e-2), f"mismatch, max_err={max_err}"

    print("KERNEL_OK")
</pallas_src>

<mosaic_0001>
module attributes {stable_mosaic.version = 11 : i64} {
  func.func @_fused_forward_kernel(%arg0: i32, %arg1: memref<16x24xf32, #tpu.memory_space<vmem>>, %arg2: memref<2x16x16xf32, #tpu.memory_space<vmem>>, %arg3: memref<3x24x128xf32, #tpu.memory_space<vmem>>, %arg4: memref<1x128xf32, #tpu.memory_space<vmem>>, %arg5: memref<3x128x256xf32, #tpu.memory_space<vmem>>, %arg6: memref<1x256xf32, #tpu.memory_space<vmem>>, %arg7: memref<8x256x10xf32, #tpu.memory_space<vmem>>, %arg8: memref<8x2x16xf32, #tpu.memory_space<vmem>>, %arg9: memref<1x10xf32, #tpu.memory_space<vmem>>, %arg10: memref<2x10xf32, #tpu.memory_space<vmem>>) attributes {dimension_semantics = [#tpu.dimension_semantics<parallel>], iteration_bounds = array<i64: 1>, scalar_prefetch = 0 : i64, scratch_operands = 0 : i64, tpu.core_type = #tpu.core_type<tc>, window_params = [{transform_indices = @transform_0, window_bounds = array<i64: 16, 24>}, {pipeline_mode = #tpu.pipeline_mode<synchronous>, transform_indices = @transform_1, window_bounds = array<i64: 2, 16, 16>}, {pipeline_mode = #tpu.pipeline_mode<synchronous>, transform_indices = @transform_2, window_bounds = array<i64: 3, 24, 128>}, {pipeline_mode = #tpu.pipeline_mode<synchronous>, transform_indices = @transform_3, window_bounds = array<i64: 1, 128>}, {pipeline_mode = #tpu.pipeline_mode<synchronous>, transform_indices = @transform_4, window_bounds = array<i64: 3, 128, 256>}, {pipeline_mode = #tpu.pipeline_mode<synchronous>, transform_indices = @transform_5, window_bounds = array<i64: 1, 256>}, {pipeline_mode = #tpu.pipeline_mode<synchronous>, transform_indices = @transform_6, window_bounds = array<i64: 8, 256, 10>}, {pipeline_mode = #tpu.pipeline_mode<synchronous>, transform_indices = @transform_7, window_bounds = array<i64: 8, 2, 16>}, {pipeline_mode = #tpu.pipeline_mode<synchronous>, transform_indices = @transform_8, window_bounds = array<i64: 1, 10>}, {transform_indices = @transform_9, window_bounds = array<i64: 2, 10>}]} {
    %c0 = arith.constant 0 : index
    %c0_0 = arith.constant 0 : index
    %c0_1 = arith.constant 0 : index
    %0 = vector.load %arg2[%c0, %c0_0, %c0_1] : memref<2x16x16xf32, #tpu.memory_space<vmem>>, vector<1x16x16xf32>
    %1 = vector.shape_cast %0 : vector<1x16x16xf32> to vector<16x16xf32>
    %c1 = arith.constant 1 : index
    %c0_2 = arith.constant 0 : index
    %c0_3 = arith.constant 0 : index
    %2 = vector.load %arg2[%c1, %c0_2, %c0_3] : memref<2x16x16xf32, #tpu.memory_space<vmem>>, vector<1x16x16xf32>
    %3 = vector.shape_cast %2 : vector<1x16x16xf32> to vector<16x16xf32>
    %c0_4 = arith.constant 0 : index
    %c0_5 = arith.constant 0 : index
    %4 = vector.load %arg1[%c0_4, %c0_5] : memref<16x24xf32, #tpu.memory_space<vmem>>, vector<16x24xf32>
    %c1_6 = arith.constant 1 : index
    %c0_7 = arith.constant 0 : index
    %c0_8 = arith.constant 0 : index
    %5 = vector.load %arg3[%c1_6, %c0_7, %c0_8] : memref<3x24x128xf32, #tpu.memory_space<vmem>>, vector<1x24x128xf32>
    %6 = vector.shape_cast %5 : vector<1x24x128xf32> to vector<24x128xf32>
    %cst = arith.constant dense<0.000000e+00> : vector<16x128xf32>
    %7 = tpu.matmul %4, %6, %cst {dimension_numbers = #tpu.dot_dimension_numbers<[1], [0], [0], [1], [0, 0, 1, 1], [], []>} : vector<16x24xf32>, vector<24x128xf32>, vector<16x128xf32> -> vector<16x128xf32>
    %cst_9 = arith.constant dense<0.000000e+00> : vector<16x24xf32>
    %8 = tpu.matmul %1, %4, %cst_9 {dimension_numbers = #tpu.dot_dimension_numbers<[1], [0], [0], [1], [0, 0, 1, 1], [], []>} : vector<16x16xf32>, vector<16x24xf32>, vector<16x24xf32> -> vector<16x24xf32>
    %c0_10 = arith.constant 0 : index
    %c0_11 = arith.constant 0 : index
    %c0_12 = arith.constant 0 : index
    %9 = vector.load %arg3[%c0_10, %c0_11, %c0_12] : memref<3x24x128xf32, #tpu.memory_space<vmem>>, vector<1x24x128xf32>
    %10 = vector.shape_cast %9 : vector<1x24x128xf32> to vector<24x128xf32>
    %cst_13 = arith.constant dense<0.000000e+00> : vector<16x128xf32>
    %11 = tpu.matmul %8, %10, %cst_13 {dimension_numbers = #tpu.dot_dimension_numbers<[1], [0], [0], [1], [0, 0, 1, 1], [], []>} : vector<16x24xf32>, vector<24x128xf32>, vector<16x128xf32> -> vector<16x128xf32>
    %12 = arith.addf %7, %11 : vector<16x128xf32>
    %cst_14 = arith.constant dense<0.000000e+00> : vector<16x24xf32>
    %13 = tpu.matmul %3, %4, %cst_14 {dimension_numbers = #tpu.dot_dimension_numbers<[1], [0], [0], [1], [0, 0, 1, 1], [], []>} : vector<16x16xf32>, vector<16x24xf32>, vector<16x24xf32> -> vector<16x24xf32>
    %c2 = arith.constant 2 : index
    %c0_15 = arith.constant 0 : index
    %c0_16 = arith.constant 0 : index
    %14 = vector.load %arg3[%c2, %c0_15, %c0_16] : memref<3x24x128xf32, #tpu.memory_space<vmem>>, vector<1x24x128xf32>
    %15 = vector.shape_cast %14 : vector<1x24x128xf32> to vector<24x128xf32>
    %cst_17 = arith.constant dense<0.000000e+00> : vector<16x128xf32>
    %16 = tpu.matmul %13, %15, %cst_17 {dimension_numbers = #tpu.dot_dimension_numbers<[1], [0], [0], [1], [0, 0, 1, 1], [], []>} : vector<16x24xf32>, vector<24x128xf32>, vector<16x128xf32> -> vector<16x128xf32>
    %17 = arith.addf %12, %16 : vector<16x128xf32>
    %c0_18 = arith.constant 0 : index
    %c0_19 = arith.constant 0 : index
    %18 = vector.load %arg4[%c0_18, %c0_19] : memref<1x128xf32, #tpu.memory_space<vmem>>, vector<1x128xf32>
    %19 = vector.broadcast %18 : vector<1x128xf32> to vector<16x128xf32>
    %20 = arith.addf %17, %19 : vector<16x128xf32>
    %c1_20 = arith.constant 1 : index
    %c0_21 = arith.constant 0 : index
    %c0_22 = arith.constant 0 : index
    %21 = vector.load %arg5[%c1_20, %c0_21, %c0_22] : memref<3x128x256xf32, #tpu.memory_space<vmem>>, vector<1x128x256xf32>
    %22 = vector.shape_cast %21 : vector<1x128x256xf32> to vector<128x256xf32>
    %cst_23 = arith.constant dense<0.000000e+00> : vector<16x256xf32>
    %23 = tpu.matmul %20, %22, %cst_23 {dimension_numbers = #tpu.dot_dimension_numbers<[1], [0], [0], [1], [0, 0, 1, 1], [], []>} : vector<16x128xf32>, vector<128x256xf32>, vector<16x256xf32> -> vector<16x256xf32>
    %cst_24 = arith.constant dense<0.000000e+00> : vector<16x128xf32>
    %24 = tpu.matmul %1, %20, %cst_24 {dimension_numbers = #tpu.dot_dimension_numbers<[1], [0], [0], [1], [0, 0, 1, 1], [], []>} : vector<16x16xf32>, vector<16x128xf32>, vector<16x128xf32> -> vector<16x128xf32>
    %c0_25 = arith.constant 0 : index
    %c0_26 = arith.constant 0 : index
    %c0_27 = arith.constant 0 : index
    %25 = vector.load %arg5[%c0_25, %c0_26, %c0_27] : memref<3x128x256xf32, #tpu.memory_space<vmem>>, vector<1x128x256xf32>
    %26 = vector.shape_cast %25 : vector<1x128x256xf32> to vector<128x256xf32>
    %cst_28 = arith.constant dense<0.000000e+00> : vector<16x256xf32>
    %27 = tpu.matmul %24, %26, %cst_28 {dimension_numbers = #tpu.dot_dimension_numbers<[1], [0], [0], [1], [0, 0, 1, 1], [], []>} : vector<16x128xf32>, vector<128x256xf32>, vector<16x256xf32> -> vector<16x256xf32>
    %28 = arith.addf %23, %27 : vector<16x256xf32>
    %cst_29 = arith.constant dense<0.000000e+00> : vector<16x128xf32>
    %29 = tpu.matmul %3, %20, %cst_29 {dimension_numbers = #tpu.dot_dimension_numbers<[1], [0], [0], [1], [0, 0, 1, 1], [], []>} : vector<16x16xf32>, vector<16x128xf32>, vector<16x128xf32> -> vector<16x128xf32>
    %c2_30 = arith.constant 2 : index
    %c0_31 = arith.constant 0 : index
    %c0_32 = arith.constant 0 : index
    %30 = vector.load %arg5[%c2_30, %c0_31, %c0_32] : memref<3x128x256xf32, #tpu.memory_space<vmem>>, vector<1x128x256xf32>
    %31 = vector.shape_cast %30 : vector<1x128x256xf32> to vector<128x256xf32>
    %cst_33 = arith.constant dense<0.000000e+00> : vector<16x256xf32>
    %32 = tpu.matmul %29, %31, %cst_33 {dimension_numbers = #tpu.dot_dimension_numbers<[1], [0], [0], [1], [0, 0, 1, 1], [], []>} : vector<16x128xf32>, vector<128x256xf32>, vector<16x256xf32> -> vector<16x256xf32>
    %33 = arith.addf %28, %32 : vector<16x256xf32>
    %c0_34 = arith.constant 0 : index
    %c0_35 = arith.constant 0 : index
    %34 = vector.load %arg6[%c0_34, %c0_35] : memref<1x256xf32, #tpu.memory_space<vmem>>, vector<1x256xf32>
    %35 = vector.broadcast %34 : vector<1x256xf32> to vector<16x256xf32>
    %36 = arith.addf %33, %35 : vector<16x256xf32>
    %cst_36 = arith.constant 0.000000e+00 : f32
    %37 = vector.broadcast %cst_36 : f32 to vector<2x10xf32>
    %c0_37 = arith.constant 0 : index
    %c0_38 = arith.constant 0 : index
    %c0_39 = arith.constant 0 : index
    %38 = vector.load %arg8[%c0_37, %c0_38, %c0_39] : memref<8x2x16xf32, #tpu.memory_space<vmem>>, vector<1x2x16xf32>
    %39 = vector.shape_cast %38 : vector<1x2x16xf32> to vector<2x16xf32>
    %cst_40 = arith.constant dense<0.000000e+00> : vector<2x256xf32>
    %40 = tpu.matmul %39, %36, %cst_40 {dimension_numbers = #tpu.dot_dimension_numbers<[1], [0], [0], [1], [0, 0, 1, 1], [], []>} : vector<2x16xf32>, vector<16x256xf32>, vector<2x256xf32> -> vector<2x256xf32>
    %c0_41 = arith.constant 0 : index
    %c0_42 = arith.constant 0 : index
    %c0_43 = arith.constant 0 : index
    %41 = vector.load %arg7[%c0_41, %c0_42, %c0_43] : memref<8x256x10xf32, #tpu.memory_space<vmem>>, vector<1x256x10xf32>
    %42 = vector.shape_cast %41 : vector<1x256x10xf32> to vector<256x10xf32>
    %cst_44 = arith.constant dense<0.000000e+00> : vector<2x10xf32>
    %43 = tpu.matmul %40, %42, %cst_44 {dimension_numbers = #tpu.dot_dimension_numbers<[1], [0], [0], [1], [0, 0, 1, 1], [], []>} : vector<2x256xf32>, vector<256x10xf32>, vector<2x10xf32> -> vector<2x10xf32>
    %44 = arith.addf %37, %43 : vector<2x10xf32>
    %c1_45 = arith.constant 1 : index
    %c0_46 = arith.constant 0 : index
    %c0_47 = arith.constant 0 : index
    %45 = vector.load %arg8[%c1_45, %c0_46, %c0_47] : memref<8x2x16xf32, #tpu.memory_space<vmem>>, vector<1x2x16xf32>
    %46 = vector.shape_cast %45 : vector<1x2x16xf32> to vector<2x16xf32>
    %cst_48 = arith.constant dense<0.000000e+00> : vector<2x256xf32>
    %47 = tpu.matmul %46, %36, %cst_48 {dimension_numbers = #tpu.dot_dimension_numbers<[1], [0], [0], [1], [0, 0, 1, 1], [], []>} : vector<2x16xf32>, vector<16x256xf32>, vector<2x256xf32> -> vector<2x256xf32>
    %c1_49 = arith.constant 1 : index
    %c0_50 = arith.constant 0 : index
    %c0_51 = arith.constant 0 : index
    %48 = vector.load %arg7[%c1_49, %c0_50, %c0_51] : memref<8x256x10xf32, #tpu.memory_space<vmem>>, vector<1x256x10xf32>
    %49 = vector.shape_cast %48 : vector<1x256x10xf32> to vector<256x10xf32>
    %cst_52 = arith.constant dense<0.000000e+00> : vector<2x10xf32>
    %50 = tpu.matmul %47, %49, %cst_52 {dimension_numbers = #tpu.dot_dimension_numbers<[1], [0], [0], [1], [0, 0, 1, 1], [], []>} : vector<2x256xf32>, vector<256x10xf32>, vector<2x10xf32> -> vector<2x10xf32>
    %51 = arith.addf %44, %50 : vector<2x10xf32>
    %c2_53 = arith.constant 2 : index
    %c0_54 = arith.constant 0 : index
    %c0_55 = arith.constant 0 : index
    %52 = vector.load %arg8[%c2_53, %c0_54, %c0_55] : memref<8x2x16xf32, #tpu.memory_space<vmem>>, vector<1x2x16xf32>
    %53 = vector.shape_cast %52 : vector<1x2x16xf32> to vector<2x16xf32>
    %cst_56 = arith.constant dense<0.000000e+00> : vector<2x256xf32>
    %54 = tpu.matmul %53, %36, %cst_56 {dimension_numbers = #tpu.dot_dimension_numbers<[1], [0], [0], [1], [0, 0, 1, 1], [], []>} : vector<2x16xf32>, vector<16x256xf32>, vector<2x256xf32> -> vector<2x256xf32>
    %c2_57 = arith.constant 2 : index
    %c0_58 = arith.constant 0 : index
    %c0_59 = arith.constant 0 : index
    %55 = vector.load %arg7[%c2_57, %c0_58, %c0_59] : memref<8x256x10xf32, #tpu.memory_space<vmem>>, vector<1x256x10xf32>
    %56 = vector.shape_cast %55 : vector<1x256x10xf32> to vector<256x10xf32>
    %cst_60 = arith.constant dense<0.000000e+00> : vector<2x10xf32>
    %57 = tpu.matmul %54, %56, %cst_60 {dimension_numbers = #tpu.dot_dimension_numbers<[1], [0], [0], [1], [0, 0, 1, 1], [], []>} : vector<2x256xf32>, vector<256x10xf32>, vector<2x10xf32> -> vector<2x10xf32>
    %58 = arith.addf %51, %57 : vector<2x10xf32>
    %c3 = arith.constant 3 : index
    %c0_61 = arith.constant 0 : index
    %c0_62 = arith.constant 0 : index
    %59 = vector.load %arg8[%c3, %c0_61, %c0_62] : memref<8x2x16xf32, #tpu.memory_space<vmem>>, vector<1x2x16xf32>
    %60 = vector.shape_cast %59 : vector<1x2x16xf32> to vector<2x16xf32>
    %cst_63 = arith.constant dense<0.000000e+00> : vector<2x256xf32>
    %61 = tpu.matmul %60, %36, %cst_63 {dimension_numbers = #tpu.dot_dimension_numbers<[1], [0], [0], [1], [0, 0, 1, 1], [], []>} : vector<2x16xf32>, vector<16x256xf32>, vector<2x256xf32> -> vector<2x256xf32>
    %c3_64 = arith.constant 3 : index
    %c0_65 = arith.constant 0 : index
    %c0_66 = arith.constant 0 : index
    %62 = vector.load %arg7[%c3_64, %c0_65, %c0_66] : memref<8x256x10xf32, #tpu.memory_space<vmem>>, vector<1x256x10xf32>
    %63 = vector.shape_cast %62 : vector<1x256x10xf32> to vector<256x10xf32>
    %cst_67 = arith.constant dense<0.000000e+00> : vector<2x10xf32>
    %64 = tpu.matmul %61, %63, %cst_67 {dimension_numbers = #tpu.dot_dimension_numbers<[1], [0], [0], [1], [0, 0, 1, 1], [], []>} : vector<2x256xf32>, vector<256x10xf32>, vector<2x10xf32> -> vector<2x10xf32>
    %65 = arith.addf %58, %64 : vector<2x10xf32>
    %c4 = arith.constant 4 : index
    %c0_68 = arith.constant 0 : index
    %c0_69 = arith.constant 0 : index
    %66 = vector.load %arg8[%c4, %c0_68, %c0_69] : memref<8x2x16xf32, #tpu.memory_space<vmem>>, vector<1x2x16xf32>
    %67 = vector.shape_cast %66 : vector<1x2x16xf32> to vector<2x16xf32>
    %cst_70 = arith.constant dense<0.000000e+00> : vector<2x256xf32>
    %68 = tpu.matmul %67, %36, %cst_70 {dimension_numbers = #tpu.dot_dimension_numbers<[1], [0], [0], [1], [0, 0, 1, 1], [], []>} : vector<2x16xf32>, vector<16x256xf32>, vector<2x256xf32> -> vector<2x256xf32>
    %c4_71 = arith.constant 4 : index
    %c0_72 = arith.constant 0 : index
    %c0_73 = arith.constant 0 : index
    %69 = vector.load %arg7[%c4_71, %c0_72, %c0_73] : memref<8x256x10xf32, #tpu.memory_space<vmem>>, vector<1x256x10xf32>
    %70 = vector.shape_cast %69 : vector<1x256x10xf32> to vector<256x10xf32>
    %cst_74 = arith.constant dense<0.000000e+00> : vector<2x10xf32>
    %71 = tpu.matmul %68, %70, %cst_74 {dimension_numbers = #tpu.dot_dimension_numbers<[1], [0], [0], [1], [0, 0, 1, 1], [], []>} : vector<2x256xf32>, vector<256x10xf32>, vector<2x10xf32> -> vector<2x10xf32>
    %72 = arith.addf %65, %71 : vector<2x10xf32>
    %c5 = arith.constant 5 : index
    %c0_75 = arith.constant 0 : index
    %c0_76 = arith.constant 0 : index
    %73 = vector.load %arg8[%c5, %c0_75, %c0_76] : memref<8x2x16xf32, #tpu.memory_space<vmem>>, vector<1x2x16xf32>
    %74 = vector.shape_cast %73 : vector<1x2x16xf32> to vector<2x16xf32>
    %cst_77 = arith.constant dense<0.000000e+00> : vector<2x256xf32>
    %75 = tpu.matmul %74, %36, %cst_77 {dimension_numbers = #tpu.dot_dimension_numbers<[1], [0], [0], [1], [0, 0, 1, 1], [], []>} : vector<2x16xf32>, vector<16x256xf32>, vector<2x256xf32> -> vector<2x256xf32>
    %c5_78 = arith.constant 5 : index
    %c0_79 = arith.constant 0 : index
    %c0_80 = arith.constant 0 : index
    %76 = vector.load %arg7[%c5_78, %c0_79, %c0_80] : memref<8x256x10xf32, #tpu.memory_space<vmem>>, vector<1x256x10xf32>
    %77 = vector.shape_cast %76 : vector<1x256x10xf32> to vector<256x10xf32>
    %cst_81 = arith.constant dense<0.000000e+00> : vector<2x10xf32>
    %78 = tpu.matmul %75, %77, %cst_81 {dimension_numbers = #tpu.dot_dimension_numbers<[1], [0], [0], [1], [0, 0, 1, 1], [], []>} : vector<2x256xf32>, vector<256x10xf32>, vector<2x10xf32> -> vector<2x10xf32>
    %79 = arith.addf %72, %78 : vector<2x10xf32>
    %c6 = arith.constant 6 : index
    %c0_82 = arith.constant 0 : index
    %c0_83 = arith.constant 0 : index
    %80 = vector.load %arg8[%c6, %c0_82, %c0_83] : memref<8x2x16xf32, #tpu.memory_space<vmem>>, vector<1x2x16xf32>
    %81 = vector.shape_cast %80 : vector<1x2x16xf32> to vector<2x16xf32>
    %cst_84 = arith.constant dense<0.000000e+00> : vector<2x256xf32>
    %82 = tpu.matmul %81, %36, %cst_84 {dimension_numbers = #tpu.dot_dimension_numbers<[1], [0], [0], [1], [0, 0, 1, 1], [], []>} : vector<2x16xf32>, vector<16x256xf32>, vector<2x256xf32> -> vector<2x256xf32>
    %c6_85 = arith.constant 6 : index
    %c0_86 = arith.constant 0 : index
    %c0_87 = arith.constant 0 : index
    %83 = vector.load %arg7[%c6_85, %c0_86, %c0_87] : memref<8x256x10xf32, #tpu.memory_space<vmem>>, vector<1x256x10xf32>
    %84 = vector.shape_cast %83 : vector<1x256x10xf32> to vector<256x10xf32>
    %cst_88 = arith.constant dense<0.000000e+00> : vector<2x10xf32>
    %85 = tpu.matmul %82, %84, %cst_88 {dimension_numbers = #tpu.dot_dimension_numbers<[1], [0], [0], [1], [0, 0, 1, 1], [], []>} : vector<2x256xf32>, vector<256x10xf32>, vector<2x10xf32> -> vector<2x10xf32>
    %86 = arith.addf %79, %85 : vector<2x10xf32>
    %c7 = arith.constant 7 : index
    %c0_89 = arith.constant 0 : index
    %c0_90 = arith.constant 0 : index
    %87 = vector.load %arg8[%c7, %c0_89, %c0_90] : memref<8x2x16xf32, #tpu.memory_space<vmem>>, vector<1x2x16xf32>
    %88 = vector.shape_cast %87 : vector<1x2x16xf32> to vector<2x16xf32>
    %cst_91 = arith.constant dense<0.000000e+00> : vector<2x256xf32>
    %89 = tpu.matmul %88, %36, %cst_91 {dimension_numbers = #tpu.dot_dimension_numbers<[1], [0], [0], [1], [0, 0, 1, 1], [], []>} : vector<2x16xf32>, vector<16x256xf32>, vector<2x256xf32> -> vector<2x256xf32>
    %c7_92 = arith.constant 7 : index
    %c0_93 = arith.constant 0 : index
    %c0_94 = arith.constant 0 : index
    %90 = vector.load %arg7[%c7_92, %c0_93, %c0_94] : memref<8x256x10xf32, #tpu.memory_space<vmem>>, vector<1x256x10xf32>
    %91 = vector.shape_cast %90 : vector<1x256x10xf32> to vector<256x10xf32>
    %cst_95 = arith.constant dense<0.000000e+00> : vector<2x10xf32>
    %92 = tpu.matmul %89, %91, %cst_95 {dimension_numbers = #tpu.dot_dimension_numbers<[1], [0], [0], [1], [0, 0, 1, 1], [], []>} : vector<2x256xf32>, vector<256x10xf32>, vector<2x10xf32> -> vector<2x10xf32>
    %93 = arith.addf %86, %92 : vector<2x10xf32>
    %c0_96 = arith.constant 0 : index
    %c0_97 = arith.constant 0 : index
    %94 = vector.load %arg9[%c0_96, %c0_97] : memref<1x10xf32, #tpu.memory_space<vmem>>, vector<1x10xf32>
    %95 = vector.broadcast %94 : vector<1x10xf32> to vector<2x10xf32>
    %96 = arith.addf %93, %95 : vector<2x10xf32>
    %c0_98 = arith.constant 0 : index
    %c0_99 = arith.constant 0 : index
    %97 = vector.load %arg10[%c0_98, %c0_99] : memref<2x10xf32, #tpu.memory_space<vmem>>, vector<2x10xf32>
    tpu.vector_store %arg10[%c0_98, %c0_99], %96 {strides = array<i32>} : memref<2x10xf32, #tpu.memory_space<vmem>>, vector<2x10xf32>,
    return
  }
  func.func @transform_0(%arg0: i32) -> (i32, i32) {
    %c0_i32 = arith.constant 0 : i32
    %c0_i32_0 = arith.constant 0 : i32
    return %arg0, %c0_i32 : i32, i32
  }
  func.func @transform_1(%arg0: i32) -> (i32, i32, i32) {
    %c0_i32 = arith.constant 0 : i32
    %c0_i32_0 = arith.constant 0 : i32
    %c0_i32_1 = arith.constant 0 : i32
    %c0_i32_2 = arith.constant 0 : i32
    return %c0_i32, %c0_i32_0, %c0_i32_1 : i32, i32, i32
  }
  func.func @transform_2(%arg0: i32) -> (i32, i32, i32) {
    %c0_i32 = arith.constant 0 : i32
    %c0_i32_0 = arith.constant 0 : i32
    %c0_i32_1 = arith.constant 0 : i32
    %c0_i32_2 = arith.constant 0 : i32
    return %c0_i32, %c0_i32_0, %c0_i32_1 : i32, i32, i32
  }
  func.func @transform_3(%arg0: i32) -> (i32, i32) {
    %c0_i32 = arith.constant 0 : i32
    %c0_i32_0 = arith.constant 0 : i32
    %c0_i32_1 = arith.constant 0 : i32
    return %c0_i32, %c0_i32_0 : i32, i32
  }
  func.func @transform_4(%arg0: i32) -> (i32, i32, i32) {
    %c0_i32 = arith.constant 0 : i32
    %c0_i32_0 = arith.constant 0 : i32
    %c0_i32_1 = arith.constant 0 : i32
    %c0_i32_2 = arith.constant 0 : i32
    return %c0_i32, %c0_i32_0, %c0_i32_1 : i32, i32, i32
  }
  func.func @transform_5(%arg0: i32) -> (i32, i32) {
    %c0_i32 = arith.constant 0 : i32
    %c0_i32_0 = arith.constant 0 : i32
    %c0_i32_1 = arith.constant 0 : i32
    return %c0_i32, %c0_i32_0 : i32, i32
  }
  func.func @transform_6(%arg0: i32) -> (i32, i32, i32) {
    %c0_i32 = arith.constant 0 : i32
    %c0_i32_0 = arith.constant 0 : i32
    %c0_i32_1 = arith.constant 0 : i32
    %c0_i32_2 = arith.constant 0 : i32
    return %c0_i32, %c0_i32_0, %c0_i32_1 : i32, i32, i32
  }
  func.func @transform_7(%arg0: i32) -> (i32, i32, i32) {
    %c0_i32 = arith.constant 0 : i32
    %c0_i32_0 = arith.constant 0 : i32
    %c0_i32_1 = arith.constant 0 : i32
    %c0_i32_2 = arith.constant 0 : i32
    return %c0_i32, %c0_i32_0, %c0_i32_1 : i32, i32, i32
  }
  func.func @transform_8(%arg0: i32) -> (i32, i32) {
    %c0_i32 = arith.constant 0 : i32
    %c0_i32_0 = arith.constant 0 : i32
    %c0_i32_1 = arith.constant 0 : i32
    return %c0_i32, %c0_i32_0 : i32, i32
  }
  func.func @transform_9(%arg0: i32) -> (i32, i32) {
    %c0_i32 = arith.constant 0 : i32
    %c0_i32_0 = arith.constant 0 : i32
    return %arg0, %c0_i32 : i32, i32
  }
}

</mosaic_0001>

<llo_original>
// kernel: simple_model_forward.1
$region0: #{simple_model_forward.1}
  #allocation0 [shape = 'u32[]', space=smem, size = 0x4, offset = 0x4, fixed_abs, tag = 'smem constant byte address 0x4 - core index']
  #allocation1 [shape = 'u32[72,128]{1,0:T(1,128)}', space=vmem, size = 0x9000, scoped, tag = 'internal scratch']
  %s0 = inlined_call_operand.vmem [shape: f32[16,24], index: 0, kind: input, shape index: {}]
  %s1 = inlined_call_operand.vmem [shape: f32[2,16,16], index: 1, kind: input, shape index: {}]
  %s2 = inlined_call_operand.vmem [shape: f32[3,24,128], index: 2, kind: input, shape index: {}]
  %s3 = inlined_call_operand.vmem [shape: f32[1,128], index: 3, kind: input, shape index: {}]
  %s4 = inlined_call_operand.vmem [shape: f32[3,128,256], index: 4, kind: input, shape index: {}]
  %s5 = inlined_call_operand.vmem [shape: f32[1,256], index: 5, kind: input, shape index: {}]
  %s6 = inlined_call_operand.vmem [shape: f32[8,256,10], index: 6, kind: input, shape index: {}]
  %s7 = inlined_call_operand.vmem [shape: f32[8,2,16], index: 7, kind: input, shape index: {}]
  %s8 = inlined_call_operand.vmem [shape: f32[1,10], index: 8, kind: input, shape index: {}]
  %s9 = inlined_call_operand.hbm [shape: f32[2,10], index: 9, kind: output, shape index: {}]
  %s10 = sld [smem:[#allocation0]]
  $region46: #{simple_model_forward.1} parent=0
    _
  %s12 = ssub.s32 1, %s10
  %s13 = scalar_select 0, %s12, %s10
  $region1: #{simple_model_forward.1} parent=0
    #allocation2 [shape = 'u8[1024]{0}', space=vmem, size = 0x400, scoped, tag = 'output window, operand 0, single buffered']
    #allocation3 [shape = 's32[1]{0}', space=sflag, size = 0x4, scoped, tag = 'scoped memory for simple_model_forward.1']
    %14 = vsyncpa [#allocation3], 0
    // Predicated region
    $region2: #{simple_model_forward.1} parent=1 // pred_check
      _
    $region3: #{simple_model_forward.1} parent=1 // pred_check_branch
      %16 = sbr.rel (0) target = $region5
    $region4: #{simple_model_forward.1} parent=1 // pred_region
      _
    $region5: #{simple_model_forward.1} parent=1 // pred_fallthru
      _
    // Predicated region
    $region6: #{simple_model_forward.1} parent=1 // pred_check
      _
    $region7: #{simple_model_forward.1} parent=1 // pred_check_branch
      %18 = sbr.rel (0) target = $region9
    $region8: #{simple_model_forward.1} parent=1 // pred_region
      _
    $region9: #{simple_model_forward.1} parent=1 // pred_fallthru
      _
    // Predicated region
    $region10: #{simple_model_forward.1} parent=1 // pred_check
      _
    $region11: #{simple_model_forward.1} parent=1 // pred_check_branch
      %20 = sbr.rel (0) target = $region13
    $region12: #{simple_model_forward.1} parent=1 // pred_region
      _
    $region13: #{simple_model_forward.1} parent=1 // pred_fallthru
      _
    // Predicated region
    $region14: #{simple_model_forward.1} parent=1 // pred_check
      _
    $region15: #{simple_model_forward.1} parent=1 // pred_check_branch
      %22 = sbr.rel (0) target = $region17
    $region16: #{simple_model_forward.1} parent=1 // pred_region
      _
    $region17: #{simple_model_forward.1} parent=1 // pred_fallthru
      _
    // Predicated region
    $region18: #{simple_model_forward.1} parent=1 // pred_check
      _
    $region19: #{simple_model_forward.1} parent=1 // pred_check_branch
      %24 = sbr.rel (0) target = $region21
    $region20: #{simple_model_forward.1} parent=1 // pred_region
      _
    $region21: #{simple_model_forward.1} parent=1 // pred_fallthru
      _
    // Predicated region
    $region22: #{simple_model_forward.1} parent=1 // pred_check
      _
    $region23: #{simple_model_forward.1} parent=1 // pred_check_branch
      %26 = sbr.rel (0) target = $region25
    $region24: #{simple_model_forward.1} parent=1 // pred_region
      _
    $region25: #{simple_model_forward.1} parent=1 // pred_fallthru
      _
    // Predicated region
    $region26: #{simple_model_forward.1} parent=1 // pred_check
      _
    $region27: #{simple_model_forward.1} parent=1 // pred_check_branch
      %28 = sbr.rel (0) target = $region29
    $region28: #{simple_model_forward.1} parent=1 // pred_region
      _
    $region29: #{simple_model_forward.1} parent=1 // pred_fallthru
      _
    // Predicated region
    $region30: #{simple_model_forward.1} parent=1 // pred_check
      _
    $region31: #{simple_model_forward.1} parent=1 // pred_check_branch
      %30 = sbr.rel (0) target = $region33
    $region32: #{simple_model_forward.1} parent=1 // pred_region
      _
    $region33: #{simple_model_forward.1} parent=1 // pred_fallthru
      _
    // Predicated region
    $region34: #{simple_model_forward.1} parent=1 // pred_check
      _
    $region35: #{simple_model_forward.1} parent=1 // pred_check_branch
      %32 = sbr.rel (0) target = $region37
    $region36: #{simple_model_forward.1} parent=1 // pred_region
      _
    $region37: #{simple_model_forward.1} parent=1 // pred_fallthru
      _
    %v33 = vld [vmem:[%s1] sm:$0xff]
    %v34 = vld [vmem:[%s1 + $0x8] sm:$0xff]
    %s35 = scalar_lea.vmem %s1, 16
    %v36 = vld [vmem:[%s35] sm:$0xff]
    %v37 = vld [vmem:[%s35 + $0x8] sm:$0xff]
    %v38 = vld [vmem:[%s0] sm:$0xff]
    %v39 = vld [vmem:[%s0 + $0x8] sm:$0xff]
    %s40 = scalar_lea.vmem %s2, 24
    %v41 = vld [vmem:[%s40] sm:$0xff]
    %v42 = vld [vmem:[%s40 + $0x8] sm:$0xff]
    %v43 = vld [vmem:[%s40 + $0x10] sm:$0xff]
    %vm44 = vcmask 130048
    %v46 = vsel %vm44, %v33, 0
    %v49 = vsel %vm44, %v34, 0
    %51 = vmatpush.msra.mxu0 0.0
    %52 = vmatpush.msra.mxu0 0.0
    %53 = vmatpush.msra.mxu0 0.0
    %54 = vmatpush.msra.mxu0 0.0
    %55 = vmatpush.msra.mxu0 0.0
    %56 = vmatpush.msra.mxu0 0.0
    %57 = vmatpush.msra.mxu0 0.0
    %58 = vmatpush.msra.mxu0 0.0
    %59 = vmatpush.msra.mxu0 0.0
    %60 = vmatpush.msra.mxu0 0.0
    %61 = vmatpush.msra.mxu0 0.0
    %62 = vmatpush.msra.mxu0 0.0
    %63 = vmatpush.msra.mxu0 0.0
    %64 = vmatpush.msra.mxu0 0.0
    %65 = vmatpush.msra.mxu0 %v39
    %66 = vmatpush.msra.mxu0 %v38
    %67 = vmatmul.f32.gmra.mxu0 %v46
    %v68 = vpop.f32.mrf.mxu0
    %v69 = vadd.f32 0.0, %v68
    %70 = vmatmul.f32.gmra.mxu0 %v49
    %v71 = vpop.f32.mrf.mxu0
    %v72 = vadd.f32 0.0, %v71
    %73 = vdwg.mxu0
    %v74 = vld [vmem:[%s2] sm:$0xff]
    %v75 = vld [vmem:[%s2 + $0x8] sm:$0xff]
    %v76 = vld [vmem:[%s2 + $0x10] sm:$0xff]
    %vm77 = vcmask 195584
    %v79 = vsel %vm77, %v69, 0
    %v82 = vsel %vm77, %v72, 0
    %84 = vmatpush.msra.mxu0 0.0
    %85 = vmatpush.msra.mxu0 0.0
    %86 = vmatpush.msra.mxu0 0.0
    %87 = vmatpush.msra.mxu0 0.0
    %88 = vmatpush.msra.mxu0 0.0
    %89 = vmatpush.msra.mxu0 0.0
    %90 = vmatpush.msra.mxu0 0.0
    %91 = vmatpush.msra.mxu0 0.0
    %92 = vmatpush.msra.mxu0 0.0
    %93 = vmatpush.msra.mxu0 0.0
    %94 = vmatpush.msra.mxu0 0.0
    %95 = vmatpush.msra.mxu0 0.0
    %96 = vmatpush.msra.mxu0 0.0
    %97 = vmatpush.msra.mxu0 %v76
    %98 = vmatpush.msra.mxu0 %v75
    %99 = vmatpush.msra.mxu0 %v74
    %100 = vmatmul.f32.gmra.mxu0 %v79
    %v101 = vpop.f32.mrf.mxu0
    %v102 = vadd.f32 0.0, %v101
    %103 = vmatmul.f32.gmra.mxu0 %v82
    %v104 = vpop.f32.mrf.mxu0
    %v105 = vadd.f32 0.0, %v104
    %106 = vdwg.mxu0
    %v108 = vsel %vm77, %v38, 0
    %v111 = vsel %vm77, %v39, 0
    %113 = vmatpush.msra.mxu0 0.0
    %114 = vmatpush.msra.mxu0 0.0
    %115 = vmatpush.msra.mxu0 0.0
    %116 = vmatpush.msra.mxu0 0.0
    %117 = vmatpush.msra.mxu0 0.0
    %118 = vmatpush.msra.mxu0 0.0
    %119 = vmatpush.msra.mxu0 0.0
    %120 = vmatpush.msra.mxu0 0.0
    %121 = vmatpush.msra.mxu0 0.0
    %122 = vmatpush.msra.mxu0 0.0
    %123 = vmatpush.msra.mxu0 0.0
    %124 = vmatpush.msra.mxu0 0.0
    %125 = vmatpush.msra.mxu0 0.0
    %126 = vmatpush.msra.mxu0 %v43
    %127 = vmatpush.msra.mxu0 %v42
    %128 = vmatpush.msra.mxu0 %v41
    %129 = vmatmul.f32.gmra.mxu0 %v108
    %v130 = vpop.f32.mrf.mxu0
    %v131 = vadd.f32 %v102, %v130
    %132 = vmatmul.f32.gmra.mxu0 %v111
    %v133 = vpop.f32.mrf.mxu0
    %v134 = vadd.f32 %v105, %v133
    %135 = vdwg.mxu0
    %v137 = vsel %vm44, %v36, 0
    %v140 = vsel %vm44, %v37, 0
    %142 = vmatpush.msra.mxu0 0.0
    %143 = vmatpush.msra.mxu0 0.0
    %144 = vmatpush.msra.mxu0 0.0
    %145 = vmatpush.msra.mxu0 0.0
    %146 = vmatpush.msra.mxu0 0.0
    %147 = vmatpush.msra.mxu0 0.0
    %148 = vmatpush.msra.mxu0 0.0
    %149 = vmatpush.msra.mxu0 0.0
    %150 = vmatpush.msra.mxu0 0.0
    %151 = vmatpush.msra.mxu0 0.0
    %152 = vmatpush.msra.mxu0 0.0
    %153 = vmatpush.msra.mxu0 0.0
    %154 = vmatpush.msra.mxu0 0.0
    %155 = vmatpush.msra.mxu0 0.0
    %156 = vmatpush.msra.mxu0 %v39
    %157 = vmatpush.msra.mxu0 %v38
    %158 = vmatmul.f32.gmra.mxu0 %v137
    %v159 = vpop.f32.mrf.mxu0
    %v160 = vadd.f32 0.0, %v159
    %161 = vmatmul.f32.gmra.mxu0 %v140
    %v162 = vpop.f32.mrf.mxu0
    %v163 = vadd.f32 0.0, %v162
    %164 = vdwg.mxu0
    %s165 = scalar_lea.vmem %s2, 48
    %v166 = vld [vmem:[%s165] sm:$0xff]
    %v167 = vld [vmem:[%s165 + $0x8] sm:$0xff]
    %v168 = vld [vmem:[%s165 + $0x10] sm:$0xff]
    %v170 = vsel %vm77, %v160, 0
    %v173 = vsel %vm77, %v163, 0
    %175 = vmatpush.msra.mxu0 0.0
    %176 = vmatpush.msra.mxu0 0.0
    %177 = vmatpush.msra.mxu0 0.0
    %178 = vmatpush.msra.mxu0 0.0
    %179 = vmatpush.msra.mxu0 0.0
    %180 = vmatpush.msra.mxu0 0.0
    %181 = vmatpush.msra.mxu0 0.0
    %182 = vmatpush.msra.mxu0 0.0
    %183 = vmatpush.msra.mxu0 0.0
    %184 = vmatpush.msra.mxu0 0.0
    %185 = vmatpush.msra.mxu0 0.0
    %186 = vmatpush.msra.mxu0 0.0
    %187 = vmatpush.msra.mxu0 0.0
    %188 = vmatpush.msra.mxu0 %v168
    %189 = vmatpush.msra.mxu0 %v167
    %190 = vmatpush.msra.mxu0 %v166
    %191 = vmatmul.f32.gmra.mxu0 %v170
    %v192 = vpop.f32.mrf.mxu0
    %v193 = vadd.f32 0.0, %v192
    %194 = vmatmul.f32.gmra.mxu0 %v173
    %v195 = vpop.f32.mrf.mxu0
    %v196 = vadd.f32 0.0, %v195
    %197 = vdwg.mxu0
    %v198 = vadd.f32 %v131, %v193
    %v199 = vadd.f32 %v134, %v196
    %v200 = vld [vmem:[%s3] sm:$0x1]
    %v202 = vperm.slane %v200, 0
    %v204 = vadd.f32 %v198, %v202
    %v205 = vadd.f32 %v199, %v202
    %s206 = scalar_lea.vmem %s4, 256
    %v207 = vld [vmem:[%s206] sm:$0xff]
    %v208 = vld [vmem:[%s206 + $0x8] sm:$0xff]
    %v209 = vld [vmem:[%s206 + $0x10] sm:$0xff]
    %v210 = vld [vmem:[%s206 + $0x18] sm:$0xff]
    %v211 = vld [vmem:[%s206 + $0x20] sm:$0xff]
    %v212 = vld [vmem:[%s206 + $0x28] sm:$0xff]
    %v213 = vld [vmem:[%s206 + $0x30] sm:$0xff]
    %v214 = vld [vmem:[%s206 + $0x38] sm:$0xff]
    %v215 = vld [vmem:[%s206 + $0x40] sm:$0xff]
    %v216 = vld [vmem:[%s206 + $0x48] sm:$0xff]
    %v217 = vld [vmem:[%s206 + $0x50] sm:$0xff]
    %v218 = vld [vmem:[%s206 + $0x58] sm:$0xff]
    %v219 = vld [vmem:[%s206 + $0x60] sm:$0xff]
    %v220 = vld [vmem:[%s206 + $0x68] sm:$0xff]
    %v221 = vld [vmem:[%s206 + $0x70] sm:$0xff]
    %v222 = vld [vmem:[%s206 + $0x78] sm:$0xff]
    %v223 = vld [vmem:[%s206 + $0x80] sm:$0xff]
    %v224 = vld [vmem:[%s206 + $0x88] sm:$0xff]
    %v225 = vld [vmem:[%s206 + $0x90] sm:$0xff]
    %v226 = vld [vmem:[%s206 + $0x98] sm:$0xff]
    %v227 = vld [vmem:[%s206 + $0xa0] sm:$0xff]
    %v228 = vld [vmem:[%s206 + $0xa8] sm:$0xff]
    %v229 = vld [vmem:[%s206 + $0xb0] sm:$0xff]
    %v230 = vld [vmem:[%s206 + $0xb8] sm:$0xff]
    %v231 = vld [vmem:[%s206 + $0xc0] sm:$0xff]
    %v232 = vld [vmem:[%s206 + $0xc8] sm:$0xff]
    %v233 = vld [vmem:[%s206 + $0xd0] sm:$0xff]
    %v234 = vld [vmem:[%s206 + $0xd8] sm:$0xff]
    %v235 = vld [vmem:[%s206 + $0xe0] sm:$0xff]
    %v236 = vld [vmem:[%s206 + $0xe8] sm:$0xff]
    %v237 = vld [vmem:[%s206 + $0xf0] sm:$0xff]
    %v238 = vld [vmem:[%s206 + $0xf8] sm:$0xff]
    %239 = vmatpush.msra.mxu0 0.0
    %240 = vmatpush.msra.mxu0 0.0
    %241 = vmatpush.msra.mxu0 0.0
    %242 = vmatpush.msra.mxu0 0.0
    %243 = vmatpush.msra.mxu0 0.0
    %244 = vmatpush.msra.mxu0 0.0
    %245 = vmatpush.msra.mxu0 0.0
    %246 = vmatpush.msra.mxu0 0.0
    %247 = vmatpush.msra.mxu0 0.0
    %248 = vmatpush.msra.mxu0 0.0
    %249 = vmatpush.msra.mxu0 0.0
    %250 = vmatpush.msra.mxu0 0.0
    %251 = vmatpush.msra.mxu0 0.0
    %252 = vmatpush.msra.mxu0 0.0
    %253 = vmatpush.msra.mxu0 %v205
    %254 = vmatpush.msra.mxu0 %v204
    %255 = vmatmul.f32.gmra.mxu0 %v46
    %v256 = vpop.f32.mrf.mxu0
    %v257 = vadd.f32 0.0, %v256
    %258 = vmatmul.f32.gmra.mxu0 %v49
    %v259 = vpop.f32.mrf.mxu0
    %v260 = vadd.f32 0.0, %v259
    %261 = vdwg.mxu0
    %v262 = vld [vmem:[%s4] sm:$0xff]
    %v263 = vld [vmem:[%s4 + $0x8] sm:$0xff]
    %v264 = vld [vmem:[%s4 + $0x10] sm:$0xff]
    %v265 = vld [vmem:[%s4 + $0x18] sm:$0xff]
    %v266 = vld [vmem:[%s4 + $0x20] sm:$0xff]
    %v267 = vld [vmem:[%s4 + $0x28] sm:$0xff]
    %v268 = vld [vmem:[%s4 + $0x30] sm:$0xff]
    %v269 = vld [vmem:[%s4 + $0x38] sm:$0xff]
    %v270 = vld [vmem:[%s4 + $0x40] sm:$0xff]
    %v271 = vld [vmem:[%s4 + $0x48] sm:$0xff]
    %v272 = vld [vmem:[%s4 + $0x50] sm:$0xff]
    %v273 = vld [vmem:[%s4 + $0x58] sm:$0xff]
    %v274 = vld [vmem:[%s4 + $0x60] sm:$0xff]
    %v275 = vld [vmem:[%s4 + $0x68] sm:$0xff]
    %v276 = vld [vmem:[%s4 + $0x70] sm:$0xff]
    %v277 = vld [vmem:[%s4 + $0x78] sm:$0xff]
    %v278 = vld [vmem:[%s4 + $0x80] sm:$0xff]
    %v279 = vld [vmem:[%s4 + $0x88] sm:$0xff]
    %v280 = vld [vmem:[%s4 + $0x90] sm:$0xff]
    %v281 = vld [vmem:[%s4 + $0x98] sm:$0xff]
    %v282 = vld [vmem:[%s4 + $0xa0] sm:$0xff]
    %v283 = vld [vmem:[%s4 + $0xa8] sm:$0xff]
    %v284 = vld [vmem:[%s4 + $0xb0] sm:$0xff]
    %v285 = vld [vmem:[%s4 + $0xb8] sm:$0xff]
    %v286 = vld [vmem:[%s4 + $0xc0] sm:$0xff]
    %v287 = vld [vmem:[%s4 + $0xc8] sm:$0xff]
    %v288 = vld [vmem:[%s4 + $0xd0] sm:$0xff]
    %v289 = vld [vmem:[%s4 + $0xd8] sm:$0xff]
    %v290 = vld [vmem:[%s4 + $0xe0] sm:$0xff]
    %v291 = vld [vmem:[%s4 + $0xe8] sm:$0xff]
    %v292 = vld [vmem:[%s4 + $0xf0] sm:$0xff]
    %v293 = vld [vmem:[%s4 + $0xf8] sm:$0xff]
    %294 = vmatpush.msra.mxu0 %v292
    %295 = vmatpush.msra.mxu0 %v290
    %296 = vmatpush.msra.mxu0 %v288
    %297 = vmatpush.msra.mxu0 %v286
    %298 = vmatpush.msra.mxu0 %v284
    %299 = vmatpush.msra.mxu0 %v282
    %300 = vmatpush.msra.mxu0 %v280
    %301 = vmatpush.msra.mxu0 %v278
    %302 = vmatpush.msra.mxu0 %v276
    %303 = vmatpush.msra.mxu0 %v274
    %304 = vmatpush.msra.mxu0 %v272
    %305 = vmatpush.msra.mxu0 %v270
    %306 = vmatpush.msra.mxu0 %v268
    %307 = vmatpush.msra.mxu0 %v266
    %308 = vmatpush.msra.mxu0 %v264
    %309 = vmatpush.msra.mxu0 %v262
    %310 = vmatmul.f32.gmra.mxu0 %v257
    %v311 = vpop.f32.mrf.mxu0
    %v312 = vadd.f32 0.0, %v311
    %313 = vmatmul.f32.gmra.mxu0 %v260
    %v314 = vpop.f32.mrf.mxu0
    %v315 = vadd.f32 0.0, %v314
    %316 = vdwg.mxu0
    %317 = vmatpush.msra.mxu0 %v293
    %318 = vmatpush.msra.mxu0 %v291
    %319 = vmatpush.msra.mxu0 %v289
    %320 = vmatpush.msra.mxu0 %v287
    %321 = vmatpush.msra.mxu0 %v285
    %322 = vmatpush.msra.mxu0 %v283
    %323 = vmatpush.msra.mxu0 %v281
    %324 = vmatpush.msra.mxu0 %v279
    %325 = vmatpush.msra.mxu0 %v277
    %326 = vmatpush.msra.mxu0 %v275
    %327 = vmatpush.msra.mxu0 %v273
    %328 = vmatpush.msra.mxu0 %v271
    %329 = vmatpush.msra.mxu0 %v269
    %330 = vmatpush.msra.mxu0 %v267
    %331 = vmatpush.msra.mxu0 %v265
    %332 = vmatpush.msra.mxu0 %v263
    %333 = vmatmul.f32.gmra.mxu0 %v257
    %v334 = vpop.f32.mrf.mxu0
    %v335 = vadd.f32 0.0, %v334
    %336 = vmatmul.f32.gmra.mxu0 %v260
    %v337 = vpop.f32.mrf.mxu0
    %v338 = vadd.f32 0.0, %v337
    %339 = vdwg.mxu0
    %340 = vmatpush.msra.mxu0 %v237
    %341 = vmatpush.msra.mxu0 %v235
    %342 = vmatpush.msra.mxu0 %v233
    %343 = vmatpush.msra.mxu0 %v231
    %344 = vmatpush.msra.mxu0 %v229
    %345 = vmatpush.msra.mxu0 %v227
    %346 = vmatpush.msra.mxu0 %v225
    %347 = vmatpush.msra.mxu0 %v223
    %348 = vmatpush.msra.mxu0 %v221
    %349 = vmatpush.msra.mxu0 %v219
    %350 = vmatpush.msra.mxu0 %v217
    %351 = vmatpush.msra.mxu0 %v215
    %352 = vmatpush.msra.mxu0 %v213
    %353 = vmatpush.msra.mxu0 %v211
    %354 = vmatpush.msra.mxu0 %v209
    %355 = vmatpush.msra.mxu0 %v207
    %356 = vmatmul.f32.gmra.mxu0 %v204
    %v357 = vpop.f32.mrf.mxu0
    %v358 = vadd.f32 %v312, %v357
    %359 = vmatmul.f32.gmra.mxu0 %v205
    %v360 = vpop.f32.mrf.mxu0
    %v361 = vadd.f32 %v315, %v360
    %362 = vdwg.mxu0
    %363 = vmatpush.msra.mxu0 %v238
    %364 = vmatpush.msra.mxu0 %v236
    %365 = vmatpush.msra.mxu0 %v234
    %366 = vmatpush.msra.mxu0 %v232
    %367 = vmatpush.msra.mxu0 %v230
    %368 = vmatpush.msra.mxu0 %v228
    %369 = vmatpush.msra.mxu0 %v226
    %370 = vmatpush.msra.mxu0 %v224
    %371 = vmatpush.msra.mxu0 %v222
    %372 = vmatpush.msra.mxu0 %v220
    %373 = vmatpush.msra.mxu0 %v218
    %374 = vmatpush.msra.mxu0 %v216
    %375 = vmatpush.msra.mxu0 %v214
    %376 = vmatpush.msra.mxu0 %v212
    %377 = vmatpush.msra.mxu0 %v210
    %378 = vmatpush.msra.mxu0 %v208
    %379 = vmatmul.f32.gmra.mxu0 %v204
    %v380 = vpop.f32.mrf.mxu0
    %v381 = vadd.f32 %v335, %v380
    %382 = vmatmul.f32.gmra.mxu0 %v205
    %v383 = vpop.f32.mrf.mxu0
    %v384 = vadd.f32 %v338, %v383
    %385 = vdwg.mxu0
    %386 = vmatpush.msra.mxu0 0.0
    %387 = vmatpush.msra.mxu0 0.0
    %388 = vmatpush.msra.mxu0 0.0
    %389 = vmatpush.msra.mxu0 0.0
    %390 = vmatpush.msra.mxu0 0.0
    %391 = vmatpush.msra.mxu0 0.0
    %392 = vmatpush.msra.mxu0 0.0
    %393 = vmatpush.msra.mxu0 0.0
    %394 = vmatpush.msra.mxu0 0.0
    %395 = vmatpush.msra.mxu0 0.0
    %396 = vmatpush.msra.mxu0 0.0
    %397 = vmatpush.msra.mxu0 0.0
    %398 = vmatpush.msra.mxu0 0.0
    %399 = vmatpush.msra.mxu0 0.0
    %400 = vmatpush.msra.mxu0 %v205
    %401 = vmatpush.msra.mxu0 %v204
    %402 = vmatmul.f32.gmra.mxu0 %v137
    %v403 = vpop.f32.mrf.mxu0
    %v404 = vadd.f32 0.0, %v403
    %405 = vmatmul.f32.gmra.mxu0 %v140
    %v406 = vpop.f32.mrf.mxu0
    %v407 = vadd.f32 0.0, %v406
    %408 = vdwg.mxu0
    %s409 = scalar_lea.vmem %s4, 512
    %v410 = vld [vmem:[%s409] sm:$0xff]
    %v411 = vld [vmem:[%s409 + $0x8] sm:$0xff]
    %v412 = vld [vmem:[%s409 + $0x10] sm:$0xff]
    %v413 = vld [vmem:[%s409 + $0x18] sm:$0xff]
    %v414 = vld [vmem:[%s409 + $0x20] sm:$0xff]
    %v415 = vld [vmem:[%s409 + $0x28] sm:$0xff]
    %v416 = vld [vmem:[%s409 + $0x30] sm:$0xff]
    %v417 = vld [vmem:[%s409 + $0x38] sm:$0xff]
    %v418 = vld [vmem:[%s409 + $0x40] sm:$0xff]
    %v419 = vld [vmem:[%s409 + $0x48] sm:$0xff]
    %v420 = vld [vmem:[%s409 + $0x50] sm:$0xff]
    %v421 = vld [vmem:[%s409 + $0x58] sm:$0xff]
    %v422 = vld [vmem:[%s409 + $0x60] sm:$0xff]
    %v423 = vld [vmem:[%s409 + $0x68] sm:$0xff]
    %v424 = vld [vmem:[%s409 + $0x70] sm:$0xff]
    %v425 = vld [vmem:[%s409 + $0x78] sm:$0xff]
    %v426 = vld [vmem:[%s409 + $0x80] sm:$0xff]
    %v427 = vld [vmem:[%s409 + $0x88] sm:$0xff]
    %v428 = vld [vmem:[%s409 + $0x90] sm:$0xff]
    %v429 = vld [vmem:[%s409 + $0x98] sm:$0xff]
    %v430 = vld [vmem:[%s409 + $0xa0] sm:$0xff]
    %v431 = vld [vmem:[%s409 + $0xa8] sm:$0xff]
    %v432 = vld [vmem:[%s409 + $0xb0] sm:$0xff]
    %v433 = vld [vmem:[%s409 + $0xb8] sm:$0xff]
    %v434 = vld [vmem:[%s409 + $0xc0] sm:$0xff]
    %v435 = vld [vmem:[%s409 + $0xc8] sm:$0xff]
    %v436 = vld [vmem:[%s409 + $0xd0] sm:$0xff]
    %v437 = vld [vmem:[%s409 + $0xd8] sm:$0xff]
    %v438 = vld [vmem:[%s409 + $0xe0] sm:$0xff]
    %v439 = vld [vmem:[%s409 + $0xe8] sm:$0xff]
    %v440 = vld [vmem:[%s409 + $0xf0] sm:$0xff]
    %v441 = vld [vmem:[%s409 + $0xf8] sm:$0xff]
    %442 = vmatpush.msra.mxu0 %v440
    %443 = vmatpush.msra.mxu0 %v438
    %444 = vmatpush.msra.mxu0 %v436
    %445 = vmatpush.msra.mxu0 %v434
    %446 = vmatpush.msra.mxu0 %v432
    %447 = vmatpush.msra.mxu0 %v430
    %448 = vmatpush.msra.mxu0 %v428
    %449 = vmatpush.msra.mxu0 %v426
    %450 = vmatpush.msra.mxu0 %v424
    %451 = vmatpush.msra.mxu0 %v422
    %452 = vmatpush.msra.mxu0 %v420
    %453 = vmatpush.msra.mxu0 %v418
    %454 = vmatpush.msra.mxu0 %v416
    %455 = vmatpush.msra.mxu0 %v414
    %456 = vmatpush.msra.mxu0 %v412
    %457 = vmatpush.msra.mxu0 %v410
    %458 = vmatmul.f32.gmra.mxu0 %v404
    %v459 = vpop.f32.mrf.mxu0
    %v460 = vadd.f32 0.0, %v459
    %461 = vmatmul.f32.gmra.mxu0 %v407
    %v462 = vpop.f32.mrf.mxu0
    %v463 = vadd.f32 0.0, %v462
    %464 = vdwg.mxu0
    %465 = vmatpush.msra.mxu0 %v441
    %466 = vmatpush.msra.mxu0 %v439
    %467 = vmatpush.msra.mxu0 %v437
    %468 = vmatpush.msra.mxu0 %v435
    %469 = vmatpush.msra.mxu0 %v433
    %470 = vmatpush.msra.mxu0 %v431
    %471 = vmatpush.msra.mxu0 %v429
    %472 = vmatpush.msra.mxu0 %v427
    %473 = vmatpush.msra.mxu0 %v425
    %474 = vmatpush.msra.mxu0 %v423
    %475 = vmatpush.msra.mxu0 %v421
    %476 = vmatpush.msra.mxu0 %v419
    %477 = vmatpush.msra.mxu0 %v417
    %478 = vmatpush.msra.mxu0 %v415
    %479 = vmatpush.msra.mxu0 %v413
    %480 = vmatpush.msra.mxu0 %v411
    %481 = vmatmul.f32.gmra.mxu0 %v404
    %v482 = vpop.f32.mrf.mxu0
    %v483 = vadd.f32 0.0, %v482
    %484 = vmatmul.f32.gmra.mxu0 %v407
    %v485 = vpop.f32.mrf.mxu0
    %v486 = vadd.f32 0.0, %v485
    %487 = vdwg.mxu0
    %v488 = vadd.f32 %v358, %v460
    %v489 = vadd.f32 %v381, %v483
    %v490 = vadd.f32 %v361, %v463
    %v491 = vadd.f32 %v384, %v486
    %v492 = vld [vmem:[%s5] sm:$0x3]
    %v494 = vperm.slane %v492, 0
    %v495 = vperm.slane %v492, 1
    %v498 = vadd.f32 %v488, %v494
    %v499 = vadd.f32 %v489, %v495
    %v500 = vadd.f32 %v490, %v494
    %v501 = vadd.f32 %v491, %v495
    %v502 = vld [vmem:[%s7] sm:$0x3]
    %v504 = vsel %vm44, %v502, 0
    %506 = vmatpush.msra.mxu0 0.0
    %507 = vmatpush.msra.mxu0 0.0
    %508 = vmatpush.msra.mxu0 0.0
    %509 = vmatpush.msra.mxu0 0.0
    %510 = vmatpush.msra.mxu0 0.0
    %511 = vmatpush.msra.mxu0 0.0
    %512 = vmatpush.msra.mxu0 0.0
    %513 = vmatpush.msra.mxu0 0.0
    %514 = vmatpush.msra.mxu0 0.0
    %515 = vmatpush.msra.mxu0 0.0
    %516 = vmatpush.msra.mxu0 0.0
    %517 = vmatpush.msra.mxu0 0.0
    %518 = vmatpush.msra.mxu0 0.0
    %519 = vmatpush.msra.mxu0 0.0
    %520 = vmatpush.msra.mxu0 %v500
    %521 = vmatpush.msra.mxu0 %v498
    %522 = vmatmul.f32.gmra.mxu0 %v504
    %v523 = vpop.f32.mrf.mxu0
    %v524 = vadd.f32 0.0, %v523
    %525 = vdwg.mxu0
    %526 = vmatpush.msra.mxu0 0.0
    %527 = vmatpush.msra.mxu0 0.0
    %528 = vmatpush.msra.mxu0 0.0
    %529 = vmatpush.msra.mxu0 0.0
    %530 = vmatpush.msra.mxu0 0.0
    %531 = vmatpush.msra.mxu0 0.0
    %532 = vmatpush.msra.mxu0 0.0
    %533 = vmatpush.msra.mxu0 0.0
    %534 = vmatpush.msra.mxu0 0.0
    %535 = vmatpush.msra.mxu0 0.0
    %536 = vmatpush.msra.mxu0 0.0
    %537 = vmatpush.msra.mxu0 0.0
    %538 = vmatpush.msra.mxu0 0.0
    %539 = vmatpush.msra.mxu0 0.0
    %540 = vmatpush.msra.mxu0 %v501
    %541 = vmatpush.msra.mxu0 %v499
    %542 = vmatmul.f32.gmra.mxu0 %v504
    %v543 = vpop.f32.mrf.mxu0
    %v544 = vadd.f32 0.0, %v543
    %545 = vdwg.mxu0
    %v546 = vld [vmem:[%s6] sm:$0xff]
    %v547 = vld [vmem:[%s6 + $0x8] sm:$0xff]
    %v548 = vld [vmem:[%s6 + $0x10] sm:$0xff]
    %v549 = vld [vmem:[%s6 + $0x18] sm:$0xff]
    %v550 = vld [vmem:[%s6 + $0x20] sm:$0xff]
    %v551 = vld [vmem:[%s6 + $0x28] sm:$0xff]
    %v552 = vld [vmem:[%s6 + $0x30] sm:$0xff]
    %v553 = vld [vmem:[%s6 + $0x38] sm:$0xff]
    %v554 = vld [vmem:[%s6 + $0x40] sm:$0xff]
    %v555 = vld [vmem:[%s6 + $0x48] sm:$0xff]
    %v556 = vld [vmem:[%s6 + $0x50] sm:$0xff]
    %v557 = vld [vmem:[%s6 + $0x58] sm:$0xff]
    %v558 = vld [vmem:[%s6 + $0x60] sm:$0xff]
    %v559 = vld [vmem:[%s6 + $0x68] sm:$0xff]
    %v560 = vld [vmem:[%s6 + $0x70] sm:$0xff]
    %v561 = vld [vmem:[%s6 + $0x78] sm:$0xff]
    %v562 = vld [vmem:[%s6 + $0x80] sm:$0xff]
    %v563 = vld [vmem:[%s6 + $0x88] sm:$0xff]
    %v564 = vld [vmem:[%s6 + $0x90] sm:$0xff]
    %v565 = vld [vmem:[%s6 + $0x98] sm:$0xff]
    %v566 = vld [vmem:[%s6 + $0xa0] sm:$0xff]
    %v567 = vld [vmem:[%s6 + $0xa8] sm:$0xff]
    %v568 = vld [vmem:[%s6 + $0xb0] sm:$0xff]
    %v569 = vld [vmem:[%s6 + $0xb8] sm:$0xff]
    %v570 = vld [vmem:[%s6 + $0xc0] sm:$0xff]
    %v571 = vld [vmem:[%s6 + $0xc8] sm:$0xff]
    %v572 = vld [vmem:[%s6 + $0xd0] sm:$0xff]
    %v573 = vld [vmem:[%s6 + $0xd8] sm:$0xff]
    %v574 = vld [vmem:[%s6 + $0xe0] sm:$0xff]
    %v575 = vld [vmem:[%s6 + $0xe8] sm:$0xff]
    %v576 = vld [vmem:[%s6 + $0xf0] sm:$0xff]
    %v577 = vld [vmem:[%s6 + $0xf8] sm:$0xff]
    %s578 = scalar_lea.vmem %s7, 2
    %v579 = vld [vmem:[%s578] sm:$0x3]
    %v581 = vsel %vm44, %v579, 0
    %583 = vmatpush.msra.mxu0 0.0
    %584 = vmatpush.msra.mxu0 0.0
    %585 = vmatpush.msra.mxu0 0.0
    %586 = vmatpush.msra.mxu0 0.0
    %587 = vmatpush.msra.mxu0 0.0
    %588 = vmatpush.msra.mxu0 0.0
    %589 = vmatpush.msra.mxu0 0.0
    %590 = vmatpush.msra.mxu0 0.0
    %591 = vmatpush.msra.mxu0 0.0
    %592 = vmatpush.msra.mxu0 0.0
    %593 = vmatpush.msra.mxu0 0.0
    %594 = vmatpush.msra.mxu0 0.0
    %595 = vmatpush.msra.mxu0 0.0
    %596 = vmatpush.msra.mxu0 0.0
    %597 = vmatpush.msra.mxu0 %v500
    %598 = vmatpush.msra.mxu0 %v498
    %599 = vmatmul.f32.gmra.mxu0 %v581
    %v600 = vpop.f32.mrf.mxu0
    %v601 = vadd.f32 0.0, %v600
    %602 = vdwg.mxu0
    %603 = vmatpush.msra.mxu0 0.0
    %604 = vmatpush.msra.mxu0 0.0
    %605 = vmatpush.msra.mxu0 0.0
    %606 = vmatpush.msra.mxu0 0.0
    %607 = vmatpush.msra.mxu0 0.0
    %608 = vmatpush.msra.mxu0 0.0
    %609 = vmatpush.msra.mxu0 0.0
    %610 = vmatpush.msra.mxu0 0.0
    %611 = vmatpush.msra.mxu0 0.0
    %612 = vmatpush.msra.mxu0 0.0
    %613 = vmatpush.msra.mxu0 0.0
    %614 = vmatpush.msra.mxu0 0.0
    %615 = vmatpush.msra.mxu0 0.0
    %616 = vmatpush.msra.mxu0 0.0
    %617 = vmatpush.msra.mxu0 %v501
    %618 = vmatpush.msra.mxu0 %v499
    %619 = vmatmul.f32.gmra.mxu0 %v581
    %v620 = vpop.f32.mrf.mxu0
    %v621 = vadd.f32 0.0, %v620
    %622 = vdwg.mxu0
    %s623 = scalar_lea.vmem %s6, 256
    %v624 = vld [vmem:[%s623] sm:$0xff]
    %v625 = vld [vmem:[%s623 + $0x8] sm:$0xff]
    %v626 = vld [vmem:[%s623 + $0x10] sm:$0xff]
    %v627 = vld [vmem:[%s623 + $0x18] sm:$0xff]
    %v628 = vld [vmem:[%s623 + $0x20] sm:$0xff]
    %v629 = vld [vmem:[%s623 + $0x28] sm:$0xff]
    %v630 = vld [vmem:[%s623 + $0x30] sm:$0xff]
    %v631 = vld [vmem:[%s623 + $0x38] sm:$0xff]
    %v632 = vld [vmem:[%s623 + $0x40] sm:$0xff]
    %v633 = vld [vmem:[%s623 + $0x48] sm:$0xff]
    %v634 = vld [vmem:[%s623 + $0x50] sm:$0xff]
    %v635 = vld [vmem:[%s623 + $0x58] sm:$0xff]
    %v636 = vld [vmem:[%s623 + $0x60] sm:$0xff]
    %v637 = vld [vmem:[%s623 + $0x68] sm:$0xff]
    %v638 = vld [vmem:[%s623 + $0x70] sm:$0xff]
    %v639 = vld [vmem:[%s623 + $0x78] sm:$0xff]
    %v640 = vld [vmem:[%s623 + $0x80] sm:$0xff]
    %v641 = vld [vmem:[%s623 + $0x88] sm:$0xff]
    %v642 = vld [vmem:[%s623 + $0x90] sm:$0xff]
    %v643 = vld [vmem:[%s623 + $0x98] sm:$0xff]
    %v644 = vld [vmem:[%s623 + $0xa0] sm:$0xff]
    %v645 = vld [vmem:[%s623 + $0xa8] sm:$0xff]
    %v646 = vld [vmem:[%s623 + $0xb0] sm:$0xff]
    %v647 = vld [vmem:[%s623 + $0xb8] sm:$0xff]
    %v648 = vld [vmem:[%s623 + $0xc0] sm:$0xff]
    %v649 = vld [vmem:[%s623 + $0xc8] sm:$0xff]
    %v650 = vld [vmem:[%s623 + $0xd0] sm:$0xff]
    %v651 = vld [vmem:[%s623 + $0xd8] sm:$0xff]
    %v652 = vld [vmem:[%s623 + $0xe0] sm:$0xff]
    %v653 = vld [vmem:[%s623 + $0xe8] sm:$0xff]
    %v654 = vld [vmem:[%s623 + $0xf0] sm:$0xff]
    %v655 = vld [vmem:[%s623 + $0xf8] sm:$0xff]
    %656 = vmatpush.msra.mxu0 %v639
    %657 = vmatpush.msra.mxu0 %v638
    %658 = vmatpush.msra.mxu0 %v637
    %659 = vmatpush.msra.mxu0 %v636
    %660 = vmatpush.msra.mxu0 %v635
    %661 = vmatpush.msra.mxu0 %v634
    %662 = vmatpush.msra.mxu0 %v633
    %663 = vmatpush.msra.mxu0 %v632
    %664 = vmatpush.msra.mxu0 %v631
    %665 = vmatpush.msra.mxu0 %v630
    %666 = vmatpush.msra.mxu0 %v629
    %667 = vmatpush.msra.mxu0 %v628
    %668 = vmatpush.msra.mxu0 %v627
    %669 = vmatpush.msra.mxu0 %v626
    %670 = vmatpush.msra.mxu0 %v625
    %671 = vmatpush.msra.mxu0 %v624
    %672 = vmatmul.f32.gmra.mxu0 %v601
    %v673 = vpop.f32.mrf.mxu0
    %v674 = vadd.f32 0.0, %v673
    %675 = vdwg.mxu0
    %676 = vmatpush.msra.mxu0 %v655
    %677 = vmatpush.msra.mxu0 %v654
    %678 = vmatpush.msra.mxu0 %v653
    %679 = vmatpush.msra.mxu0 %v652
    %680 = vmatpush.msra.mxu0 %v651
    %681 = vmatpush.msra.mxu0 %v650
    %682 = vmatpush.msra.mxu0 %v649
    %683 = vmatpush.msra.mxu0 %v648
    %684 = vmatpush.msra.mxu0 %v647
    %685 = vmatpush.msra.mxu0 %v646
    %686 = vmatpush.msra.mxu0 %v645
    %687 = vmatpush.msra.mxu0 %v644
    %688 = vmatpush.msra.mxu0 %v643
    %689 = vmatpush.msra.mxu0 %v642
    %690 = vmatpush.msra.mxu0 %v641
    %691 = vmatpush.msra.mxu0 %v640
    %692 = vmatmul.f32.gmra.mxu0 %v621
    %v693 = vpop.f32.mrf.mxu0
    %v694 = vadd.f32 %v674, %v693
    %695 = vdwg.mxu0
    %696 = vmatpush.msra.mxu0 %v561
    %697 = vmatpush.msra.mxu0 %v560
    %698 = vmatpush.msra.mxu0 %v559
    %699 = vmatpush.msra.mxu0 %v558
    %700 = vmatpush.msra.mxu0 %v557
    %701 = vmatpush.msra.mxu0 %v556
    %702 = vmatpush.msra.mxu0 %v555
    %703 = vmatpush.msra.mxu0 %v554
    %704 = vmatpush.msra.mxu0 %v553
    %705 = vmatpush.msra.mxu0 %v552
    %706 = vmatpush.msra.mxu0 %v551
    %707 = vmatpush.msra.mxu0 %v550
    %708 = vmatpush.msra.mxu0 %v549
    %709 = vmatpush.msra.mxu0 %v548
    %710 = vmatpush.msra.mxu0 %v547
    %711 = vmatpush.msra.mxu0 %v546
    %712 = vmatmul.f32.gmra.mxu0 %v524
    %v713 = vpop.f32.mrf.mxu0
    %v714 = vadd.f32 %v694, %v713
    %715 = vdwg.mxu0
    %716 = vmatpush.msra.mxu0 %v577
    %717 = vmatpush.msra.mxu0 %v576
    %718 = vmatpush.msra.mxu0 %v575
    %719 = vmatpush.msra.mxu0 %v574
    %720 = vmatpush.msra.mxu0 %v573
    %721 = vmatpush.msra.mxu0 %v572
    %722 = vmatpush.msra.mxu0 %v571
    %723 = vmatpush.msra.mxu0 %v570
    %724 = vmatpush.msra.mxu0 %v569
    %725 = vmatpush.msra.mxu0 %v568
    %726 = vmatpush.msra.mxu0 %v567
    %727 = vmatpush.msra.mxu0 %v566
    %728 = vmatpush.msra.mxu0 %v565
    %729 = vmatpush.msra.mxu0 %v564
    %730 = vmatpush.msra.mxu0 %v563
    %731 = vmatpush.msra.mxu0 %v562
    %732 = vmatmul.f32.gmra.mxu0 %v544
    %v733 = vpop.f32.mrf.mxu0
    %v734 = vadd.f32 %v714, %v733
    %735 = vdwg.mxu0
    %s736 = scalar_lea.vmem %s7, 4
    %v737 = vld [vmem:[%s736] sm:$0x3]
    %v739 = vsel %vm44, %v737, 0
    %741 = vmatpush.msra.mxu0 0.0
    %742 = vmatpush.msra.mxu0 0.0
    %743 = vmatpush.msra.mxu0 0.0
    %744 = vmatpush.msra.mxu0 0.0
    %745 = vmatpush.msra.mxu0 0.0
    %746 = vmatpush.msra.mxu0 0.0
    %747 = vmatpush.msra.mxu0 0.0
    %748 = vmatpush.msra.mxu0 0.0
    %749 = vmatpush.msra.mxu0 0.0
    %750 = vmatpush.msra.mxu0 0.0
    %751 = vmatpush.msra.mxu0 0.0
    %752 = vmatpush.msra.mxu0 0.0
    %753 = vmatpush.msra.mxu0 0.0
    %754 = vmatpush.msra.mxu0 0.0
    %755 = vmatpush.msra.mxu0 %v500
    %756 = vmatpush.msra.mxu0 %v498
    %757 = vmatmul.f32.gmra.mxu0 %v739
    %v758 = vpop.f32.mrf.mxu0
    %v759 = vadd.f32 0.0, %v758
    %760 = vdwg.mxu0
    %761 = vmatpush.msra.mxu0 0.0
    %762 = vmatpush.msra.mxu0 0.0
    %763 = vmatpush.msra.mxu0 0.0
    %764 = vmatpush.msra.mxu0 0.0
    %765 = vmatpush.msra.mxu0 0.0
    %766 = vmatpush.msra.mxu0 0.0
    %767 = vmatpush.msra.mxu0 0.0
    %768 = vmatpush.msra.mxu0 0.0
    %769 = vmatpush.msra.mxu0 0.0
    %770 = vmatpush.msra.mxu0 0.0
    %771 = vmatpush.msra.mxu0 0.0
    %772 = vmatpush.msra.mxu0 0.0
    %773 = vmatpush.msra.mxu0 0.0
    %774 = vmatpush.msra.mxu0 0.0
    %775 = vmatpush.msra.mxu0 %v501
    %776 = vmatpush.msra.mxu0 %v499
    %777 = vmatmul.f32.gmra.mxu0 %v739
    %v778 = vpop.f32.mrf.mxu0
    %v779 = vadd.f32 0.0, %v778
    %780 = vdwg.mxu0
    %s781 = scalar_lea.vmem %s6, 512
    %v782 = vld [vmem:[%s781] sm:$0xff]
    %v783 = vld [vmem:[%s781 + $0x8] sm:$0xff]
    %v784 = vld [vmem:[%s781 + $0x10] sm:$0xff]
    %v785 = vld [vmem:[%s781 + $0x18] sm:$0xff]
    %v786 = vld [vmem:[%s781 + $0x20] sm:$0xff]
    %v787 = vld [vmem:[%s781 + $0x28] sm:$0xff]
    %v788 = vld [vmem:[%s781 + $0x30] sm:$0xff]
    %v789 = vld [vmem:[%s781 + $0x38] sm:$0xff]
    %v790 = vld [vmem:[%s781 + $0x40] sm:$0xff]
    %v791 = vld [vmem:[%s781 + $0x48] sm:$0xff]
    %v792 = vld [vmem:[%s781 + $0x50] sm:$0xff]
    %v793 = vld [vmem:[%s781 + $0x58] sm:$0xff]
    %v794 = vld [vmem:[%s781 + $0x60] sm:$0xff]
    %v795 = vld [vmem:[%s781 + $0x68] sm:$0xff]
    %v796 = vld [vmem:[%s781 + $0x70] sm:$0xff]
    %v797 = vld [vmem:[%s781 + $0x78] sm:$0xff]
    %v798 = vld [vmem:[%s781 + $0x80] sm:$0xff]
    %v799 = vld [vmem:[%s781 + $0x88] sm:$0xff]
    %v800 = vld [vmem:[%s781 + $0x90] sm:$0xff]
    %v801 = vld [vmem:[%s781 + $0x98] sm:$0xff]
    %v802 = vld [vmem:[%s781 + $0xa0] sm:$0xff]
    %v803 = vld [vmem:[%s781 + $0xa8] sm:$0xff]
    %v804 = vld [vmem:[%s781 + $0xb0] sm:$0xff]
    %v805 = vld [vmem:[%s781 + $0xb8] sm:$0xff]
    %v806 = vld [vmem:[%s781 + $0xc0] sm:$0xff]
    %v807 = vld [vmem:[%s781 + $0xc8] sm:$0xff]
    %v808 = vld [vmem:[%s781 + $0xd0] sm:$0xff]
    %v809 = vld [vmem:[%s781 + $0xd8] sm:$0xff]
    %v810 = vld [vmem:[%s781 + $0xe0] sm:$0xff]
    %v811 = vld [vmem:[%s781 + $0xe8] sm:$0xff]
    %v812 = vld [vmem:[%s781 + $0xf0] sm:$0xff]
    %v813 = vld [vmem:[%s781 + $0xf8] sm:$0xff]
    %814 = vmatpush.msra.mxu0 %v797
    %815 = vmatpush.msra.mxu0 %v796
    %816 = vmatpush.msra.mxu0 %v795
    %817 = vmatpush.msra.mxu0 %v794
    %818 = vmatpush.msra.mxu0 %v793
    %819 = vmatpush.msra.mxu0 %v792
    %820 = vmatpush.msra.mxu0 %v791
    %821 = vmatpush.msra.mxu0 %v790
    %822 = vmatpush.msra.mxu0 %v789
    %823 = vmatpush.msra.mxu0 %v788
    %824 = vmatpush.msra.mxu0 %v787
    %825 = vmatpush.msra.mxu0 %v786
    %826 = vmatpush.msra.mxu0 %v785
    %827 = vmatpush.msra.mxu0 %v784
    %828 = vmatpush.msra.mxu0 %v783
    %829 = vmatpush.msra.mxu0 %v782
    %830 = vmatmul.f32.gmra.mxu0 %v759
    %v831 = vpop.f32.mrf.mxu0
    %v832 = vadd.f32 0.0, %v831
    %833 = vdwg.mxu0
    %834 = vmatpush.msra.mxu0 %v813
    %835 = vmatpush.msra.mxu0 %v812
    %836 = vmatpush.msra.mxu0 %v811
    %837 = vmatpush.msra.mxu0 %v810
    %838 = vmatpush.msra.mxu0 %v809
    %839 = vmatpush.msra.mxu0 %v808
    %840 = vmatpush.msra.mxu0 %v807
    %841 = vmatpush.msra.mxu0 %v806
    %842 = vmatpush.msra.mxu0 %v805
    %843 = vmatpush.msra.mxu0 %v804
    %844 = vmatpush.msra.mxu0 %v803
    %845 = vmatpush.msra.mxu0 %v802
    %846 = vmatpush.msra.mxu0 %v801
    %847 = vmatpush.msra.mxu0 %v800
    %848 = vmatpush.msra.mxu0 %v799
    %849 = vmatpush.msra.mxu0 %v798
    %850 = vmatmul.f32.gmra.mxu0 %v779
    %v851 = vpop.f32.mrf.mxu0
    %v852 = vadd.f32 %v832, %v851
    %853 = vdwg.mxu0
    %v854 = vadd.f32 %v734, %v852
    %s855 = scalar_lea.vmem %s7, 6
    %v856 = vld [vmem:[%s855] sm:$0x3]
    %v858 = vsel %vm44, %v856, 0
    %860 = vmatpush.msra.mxu0 0.0
    %861 = vmatpush.msra.mxu0 0.0
    %862 = vmatpush.msra.mxu0 0.0
    %863 = vmatpush.msra.mxu0 0.0
    %864 = vmatpush.msra.mxu0 0.0
    %865 = vmatpush.msra.mxu0 0.0
    %866 = vmatpush.msra.mxu0 0.0
    %867 = vmatpush.msra.mxu0 0.0
    %868 = vmatpush.msra.mxu0 0.0
    %869 = vmatpush.msra.mxu0 0.0
    %870 = vmatpush.msra.mxu0 0.0
    %871 = vmatpush.msra.mxu0 0.0
    %872 = vmatpush.msra.mxu0 0.0
    %873 = vmatpush.msra.mxu0 0.0
    %874 = vmatpush.msra.mxu0 %v500
    %875 = vmatpush.msra.mxu0 %v498
    %876 = vmatmul.f32.gmra.mxu0 %v858
    %v877 = vpop.f32.mrf.mxu0
    %v878 = vadd.f32 0.0, %v877
    %879 = vdwg.mxu0
    %880 = vmatpush.msra.mxu0 0.0
    %881 = vmatpush.msra.mxu0 0.0
    %882 = vmatpush.msra.mxu0 0.0
    %883 = vmatpush.msra.mxu0 0.0
    %884 = vmatpush.msra.mxu0 0.0
    %885 = vmatpush.msra.mxu0 0.0
    %886 = vmatpush.msra.mxu0 0.0
    %887 = vmatpush.msra.mxu0 0.0
    %888 = vmatpush.msra.mxu0 0.0
    %889 = vmatpush.msra.mxu0 0.0
    %890 = vmatpush.msra.mxu0 0.0
    %891 = vmatpush.msra.mxu0 0.0
    %892 = vmatpush.msra.mxu0 0.0
    %893 = vmatpush.msra.mxu0 0.0
    %894 = vmatpush.msra.mxu0 %v501
    %895 = vmatpush.msra.mxu0 %v499
    %896 = vmatmul.f32.gmra.mxu0 %v858
    %v897 = vpop.f32.mrf.mxu0
    %v898 = vadd.f32 0.0, %v897
    %899 = vdwg.mxu0
    %s900 = scalar_lea.vmem %s6, 768
    %v901 = vld [vmem:[%s900] sm:$0xff]
    %v902 = vld [vmem:[%s900 + $0x8] sm:$0xff]
    %v903 = vld [vmem:[%s900 + $0x10] sm:$0xff]
    %v904 = vld [vmem:[%s900 + $0x18] sm:$0xff]
    %v905 = vld [vmem:[%s900 + $0x20] sm:$0xff]
    %v906 = vld [vmem:[%s900 + $0x28] sm:$0xff]
    %v907 = vld [vmem:[%s900 + $0x30] sm:$0xff]
    %v908 = vld [vmem:[%s900 + $0x38] sm:$0xff]
    %v909 = vld [vmem:[%s900 + $0x40] sm:$0xff]
    %v910 = vld [vmem:[%s900 + $0x48] sm:$0xff]
    %v911 = vld [vmem:[%s900 + $0x50] sm:$0xff]
    %v912 = vld [vmem:[%s900 + $0x58] sm:$0xff]
    %v913 = vld [vmem:[%s900 + $0x60] sm:$0xff]
    %v914 = vld [vmem:[%s900 + $0x68] sm:$0xff]
    %v915 = vld [vmem:[%s900 + $0x70] sm:$0xff]
    %v916 = vld [vmem:[%s900 + $0x78] sm:$0xff]
    %v917 = vld [vmem:[%s900 + $0x80] sm:$0xff]
    %v918 = vld [vmem:[%s900 + $0x88] sm:$0xff]
    %v919 = vld [vmem:[%s900 + $0x90] sm:$0xff]
    %v920 = vld [vmem:[%s900 + $0x98] sm:$0xff]
    %v921 = vld [vmem:[%s900 + $0xa0] sm:$0xff]
    %v922 = vld [vmem:[%s900 + $0xa8] sm:$0xff]
    %v923 = vld [vmem:[%s900 + $0xb0] sm:$0xff]
    %v924 = vld [vmem:[%s900 + $0xb8] sm:$0xff]
    %v925 = vld [vmem:[%s900 + $0xc0] sm:$0xff]
    %v926 = vld [vmem:[%s900 + $0xc8] sm:$0xff]
    %v927 = vld [vmem:[%s900 + $0xd0] sm:$0xff]
    %v928 = vld [vmem:[%s900 + $0xd8] sm:$0xff]
    %v929 = vld [vmem:[%s900 + $0xe0] sm:$0xff]
    %v930 = vld [vmem:[%s900 + $0xe8] sm:$0xff]
    %v931 = vld [vmem:[%s900 + $0xf0] sm:$0xff]
    %v932 = vld [vmem:[%s900 + $0xf8] sm:$0xff]
    %933 = vmatpush.msra.mxu0 %v916
    %934 = vmatpush.msra.mxu0 %v915
    %935 = vmatpush.msra.mxu0 %v914
    %936 = vmatpush.msra.mxu0 %v913
    %937 = vmatpush.msra.mxu0 %v912
    %938 = vmatpush.msra.mxu0 %v911
    %939 = vmatpush.msra.mxu0 %v910
    %940 = vmatpush.msra.mxu0 %v909
    %941 = vmatpush.msra.mxu0 %v908
    %942 = vmatpush.msra.mxu0 %v907
    %943 = vmatpush.msra.mxu0 %v906
    %944 = vmatpush.msra.mxu0 %v905
    %945 = vmatpush.msra.mxu0 %v904
    %946 = vmatpush.msra.mxu0 %v903
    %947 = vmatpush.msra.mxu0 %v902
    %948 = vmatpush.msra.mxu0 %v901
    %949 = vmatmul.f32.gmra.mxu0 %v878
    %v950 = vpop.f32.mrf.mxu0
    %v951 = vadd.f32 0.0, %v950
    %952 = vdwg.mxu0
    %953 = vmatpush.msra.mxu0 %v932
    %954 = vmatpush.msra.mxu0 %v931
    %955 = vmatpush.msra.mxu0 %v930
    %956 = vmatpush.msra.mxu0 %v929
    %957 = vmatpush.msra.mxu0 %v928
    %958 = vmatpush.msra.mxu0 %v927
    %959 = vmatpush.msra.mxu0 %v926
    %960 = vmatpush.msra.mxu0 %v925
    %961 = vmatpush.msra.mxu0 %v924
    %962 = vmatpush.msra.mxu0 %v923
    %963 = vmatpush.msra.mxu0 %v922
    %964 = vmatpush.msra.mxu0 %v921
    %965 = vmatpush.msra.mxu0 %v920
    %966 = vmatpush.msra.mxu0 %v919
    %967 = vmatpush.msra.mxu0 %v918
    %968 = vmatpush.msra.mxu0 %v917
    %969 = vmatmul.f32.gmra.mxu0 %v898
    %v970 = vpop.f32.mrf.mxu0
    %v971 = vadd.f32 %v951, %v970
    %972 = vdwg.mxu0
    %v973 = vadd.f32 %v854, %v971
    %s974 = scalar_lea.vmem %s7, 8
    %v975 = vld [vmem:[%s974] sm:$0x3]
    %v977 = vsel %vm44, %v975, 0
    %979 = vmatpush.msra.mxu0 0.0
    %980 = vmatpush.msra.mxu0 0.0
    %981 = vmatpush.msra.mxu0 0.0
    %982 = vmatpush.msra.mxu0 0.0
    %983 = vmatpush.msra.mxu0 0.0
    %984 = vmatpush.msra.mxu0 0.0
    %985 = vmatpush.msra.mxu0 0.0
    %986 = vmatpush.msra.mxu0 0.0
    %987 = vmatpush.msra.mxu0 0.0
    %988 = vmatpush.msra.mxu0 0.0
    %989 = vmatpush.msra.mxu0 0.0
    %990 = vmatpush.msra.mxu0 0.0
    %991 = vmatpush.msra.mxu0 0.0
    %992 = vmatpush.msra.mxu0 0.0
    %993 = vmatpush.msra.mxu0 %v500
    %994 = vmatpush.msra.mxu0 %v498
    %995 = vmatmul.f32.gmra.mxu0 %v977
    %v996 = vpop.f32.mrf.mxu0
    %v997 = vadd.f32 0.0, %v996
    %998 = vdwg.mxu0
    %999 = vmatpush.msra.mxu0 0.0
    %1000 = vmatpush.msra.mxu0 0.0
    %1001 = vmatpush.msra.mxu0 0.0
    %1002 = vmatpush.msra.mxu0 0.0
    %1003 = vmatpush.msra.mxu0 0.0
    %1004 = vmatpush.msra.mxu0 0.0
    %1005 = vmatpush.msra.mxu0 0.0
    %1006 = vmatpush.msra.mxu0 0.0
    %1007 = vmatpush.msra.mxu0 0.0
    %1008 = vmatpush.msra.mxu0 0.0
    %1009 = vmatpush.msra.mxu0 0.0
    %1010 = vmatpush.msra.mxu0 0.0
    %1011 = vmatpush.msra.mxu0 0.0
    %1012 = vmatpush.msra.mxu0 0.0
    %1013 = vmatpush.msra.mxu0 %v501
    %1014 = vmatpush.msra.mxu0 %v499
    %1015 = vmatmul.f32.gmra.mxu0 %v977
    %v1016 = vpop.f32.mrf.mxu0
    %v1017 = vadd.f32 0.0, %v1016
    %1018 = vdwg.mxu0
    %s1019 = scalar_lea.vmem %s6, 1024
    %v1020 = vld [vmem:[%s1019] sm:$0xff]
    %v1021 = vld [vmem:[%s1019 + $0x8] sm:$0xff]
    %v1022 = vld [vmem:[%s1019 + $0x10] sm:$0xff]
    %v1023 = vld [vmem:[%s1019 + $0x18] sm:$0xff]
    %v1024 = vld [vmem:[%s1019 + $0x20] sm:$0xff]
    %v1025 = vld [vmem:[%s1019 + $0x28] sm:$0xff]
    %v1026 = vld [vmem:[%s1019 + $0x30] sm:$0xff]
    %v1027 = vld [vmem:[%s1019 + $0x38] sm:$0xff]
    %v1028 = vld [vmem:[%s1019 + $0x40] sm:$0xff]
    %v1029 = vld [vmem:[%s1019 + $0x48] sm:$0xff]
    %v1030 = vld [vmem:[%s1019 + $0x50] sm:$0xff]
    %v1031 = vld [vmem:[%s1019 + $0x58] sm:$0xff]
    %v1032 = vld [vmem:[%s1019 + $0x60] sm:$0xff]
    %v1033 = vld [vmem:[%s1019 + $0x68] sm:$0xff]
    %v1034 = vld [vmem:[%s1019 + $0x70] sm:$0xff]
    %v1035 = vld [vmem:[%s1019 + $0x78] sm:$0xff]
    %v1036 = vld [vmem:[%s1019 + $0x80] sm:$0xff]
    %v1037 = vld [vmem:[%s1019 + $0x88] sm:$0xff]
    %v1038 = vld [vmem:[%s1019 + $0x90] sm:$0xff]
    %v1039 = vld [vmem:[%s1019 + $0x98] sm:$0xff]
    %v1040 = vld [vmem:[%s1019 + $0xa0] sm:$0xff]
    %v1041 = vld [vmem:[%s1019 + $0xa8] sm:$0xff]
    %v1042 = vld [vmem:[%s1019 + $0xb0] sm:$0xff]
    %v1043 = vld [vmem:[%s1019 + $0xb8] sm:$0xff]
    %v1044 = vld [vmem:[%s1019 + $0xc0] sm:$0xff]
    %v1045 = vld [vmem:[%s1019 + $0xc8] sm:$0xff]
    %v1046 = vld [vmem:[%s1019 + $0xd0] sm:$0xff]
    %v1047 = vld [vmem:[%s1019 + $0xd8] sm:$0xff]
    %v1048 = vld [vmem:[%s1019 + $0xe0] sm:$0xff]
    %v1049 = vld [vmem:[%s1019 + $0xe8] sm:$0xff]
    %v1050 = vld [vmem:[%s1019 + $0xf0] sm:$0xff]
    %v1051 = vld [vmem:[%s1019 + $0xf8] sm:$0xff]
    %1052 = vmatpush.msra.mxu0 %v1035
    %1053 = vmatpush.msra.mxu0 %v1034
    %1054 = vmatpush.msra.mxu0 %v1033
    %1055 = vmatpush.msra.mxu0 %v1032
    %1056 = vmatpush.msra.mxu0 %v1031
    %1057 = vmatpush.msra.mxu0 %v1030
    %1058 = vmatpush.msra.mxu0 %v1029
    %1059 = vmatpush.msra.mxu0 %v1028
    %1060 = vmatpush.msra.mxu0 %v1027
    %1061 = vmatpush.msra.mxu0 %v1026
    %1062 = vmatpush.msra.mxu0 %v1025
    %1063 = vmatpush.msra.mxu0 %v1024
    %1064 = vmatpush.msra.mxu0 %v1023
    %1065 = vmatpush.msra.mxu0 %v1022
    %1066 = vmatpush.msra.mxu0 %v1021
    %1067 = vmatpush.msra.mxu0 %v1020
    %1068 = vmatmul.f32.gmra.mxu0 %v997
    %v1069 = vpop.f32.mrf.mxu0
    %v1070 = vadd.f32 0.0, %v1069
    %1071 = vdwg.mxu0
    %1072 = vmatpush.msra.mxu0 %v1051
    %1073 = vmatpush.msra.mxu0 %v1050
    %1074 = vmatpush.msra.mxu0 %v1049
    %1075 = vmatpush.msra.mxu0 %v1048
    %1076 = vmatpush.msra.mxu0 %v1047
    %1077 = vmatpush.msra.mxu0 %v1046
    %1078 = vmatpush.msra.mxu0 %v1045
    %1079 = vmatpush.msra.mxu0 %v1044
    %1080 = vmatpush.msra.mxu0 %v1043
    %1081 = vmatpush.msra.mxu0 %v1042
    %1082 = vmatpush.msra.mxu0 %v1041
    %1083 = vmatpush.msra.mxu0 %v1040
    %1084 = vmatpush.msra.mxu0 %v1039
    %1085 = vmatpush.msra.mxu0 %v1038
    %1086 = vmatpush.msra.mxu0 %v1037
    %1087 = vmatpush.msra.mxu0 %v1036
    %1088 = vmatmul.f32.gmra.mxu0 %v1017
    %v1089 = vpop.f32.mrf.mxu0
    %v1090 = vadd.f32 %v1070, %v1089
    %1091 = vdwg.mxu0
    %v1092 = vadd.f32 %v973, %v1090
    %s1093 = scalar_lea.vmem %s7, 10
    %v1094 = vld [vmem:[%s1093] sm:$0x3]
    %v1096 = vsel %vm44, %v1094, 0
    %1098 = vmatpush.msra.mxu0 0.0
    %1099 = vmatpush.msra.mxu0 0.0
    %1100 = vmatpush.msra.mxu0 0.0
    %1101 = vmatpush.msra.mxu0 0.0
    %1102 = vmatpush.msra.mxu0 0.0
    %1103 = vmatpush.msra.mxu0 0.0
    %1104 = vmatpush.msra.mxu0 0.0
    %1105 = vmatpush.msra.mxu0 0.0
    %1106 = vmatpush.msra.mxu0 0.0
    %1107 = vmatpush.msra.mxu0 0.0
    %1108 = vmatpush.msra.mxu0 0.0
    %1109 = vmatpush.msra.mxu0 0.0
    %1110 = vmatpush.msra.mxu0 0.0
    %1111 = vmatpush.msra.mxu0 0.0
    %1112 = vmatpush.msra.mxu0 %v500
    %1113 = vmatpush.msra.mxu0 %v498
    %1114 = vmatmul.f32.gmra.mxu0 %v1096
    %v1115 = vpop.f32.mrf.mxu0
    %v1116 = vadd.f32 0.0, %v1115
    %1117 = vdwg.mxu0
    %1118 = vmatpush.msra.mxu0 0.0
    %1119 = vmatpush.msra.mxu0 0.0
    %1120 = vmatpush.msra.mxu0 0.0
    %1121 = vmatpush.msra.mxu0 0.0
    %1122 = vmatpush.msra.mxu0 0.0
    %1123 = vmatpush.msra.mxu0 0.0
    %1124 = vmatpush.msra.mxu0 0.0
    %1125 = vmatpush.msra.mxu0 0.0
    %1126 = vmatpush.msra.mxu0 0.0
    %1127 = vmatpush.msra.mxu0 0.0
    %1128 = vmatpush.msra.mxu0 0.0
    %1129 = vmatpush.msra.mxu0 0.0
    %1130 = vmatpush.msra.mxu0 0.0
    %1131 = vmatpush.msra.mxu0 0.0
    %1132 = vmatpush.msra.mxu0 %v501
    %1133 = vmatpush.msra.mxu0 %v499
    %1134 = vmatmul.f32.gmra.mxu0 %v1096
    %v1135 = vpop.f32.mrf.mxu0
    %v1136 = vadd.f32 0.0, %v1135
    %1137 = vdwg.mxu0
    %s1138 = scalar_lea.vmem %s6, 1280
    %v1139 = vld [vmem:[%s1138] sm:$0xff]
    %v1140 = vld [vmem:[%s1138 + $0x8] sm:$0xff]
    %v1141 = vld [vmem:[%s1138 + $0x10] sm:$0xff]
    %v1142 = vld [vmem:[%s1138 + $0x18] sm:$0xff]
    %v1143 = vld [vmem:[%s1138 + $0x20] sm:$0xff]
    %v1144 = vld [vmem:[%s1138 + $0x28] sm:$0xff]
    %v1145 = vld [vmem:[%s1138 + $0x30] sm:$0xff]
    %v1146 = vld [vmem:[%s1138 + $0x38] sm:$0xff]
    %v1147 = vld [vmem:[%s1138 + $0x40] sm:$0xff]
    %v1148 = vld [vmem:[%s1138 + $0x48] sm:$0xff]
    %v1149 = vld [vmem:[%s1138 + $0x50] sm:$0xff]
    %v1150 = vld [vmem:[%s1138 + $0x58] sm:$0xff]
    %v1151 = vld [vmem:[%s1138 + $0x60] sm:$0xff]
    %v1152 = vld [vmem:[%s1138 + $0x68] sm:$0xff]
    %v1153 = vld [vmem:[%s1138 + $0x70] sm:$0xff]
    %v1154 = vld [vmem:[%s1138 + $0x78] sm:$0xff]
    %v1155 = vld [vmem:[%s1138 + $0x80] sm:$0xff]
    %v1156 = vld [vmem:[%s1138 + $0x88] sm:$0xff]
    %v1157 = vld [vmem:[%s1138 + $0x90] sm:$0xff]
    %v1158 = vld [vmem:[%s1138 + $0x98] sm:$0xff]
    %v1159 = vld [vmem:[%s1138 + $0xa0] sm:$0xff]
    %v1160 = vld [vmem:[%s1138 + $0xa8] sm:$0xff]
    %v1161 = vld [vmem:[%s1138 + $0xb0] sm:$0xff]
    %v1162 = vld [vmem:[%s1138 + $0xb8] sm:$0xff]
    %v1163 = vld [vmem:[%s1138 + $0xc0] sm:$0xff]
    %v1164 = vld [vmem:[%s1138 + $0xc8] sm:$0xff]
    %v1165 = vld [vmem:[%s1138 + $0xd0] sm:$0xff]
    %v1166 = vld [vmem:[%s1138 + $0xd8] sm:$0xff]
    %v1167 = vld [vmem:[%s1138 + $0xe0] sm:$0xff]
    %v1168 = vld [vmem:[%s1138 + $0xe8] sm:$0xff]
    %v1169 = vld [vmem:[%s1138 + $0xf0] sm:$0xff]
    %v1170 = vld [vmem:[%s1138 + $0xf8] sm:$0xff]
    %1171 = vmatpush.msra.mxu0 %v1154
    %1172 = vmatpush.msra.mxu0 %v1153
    %1173 = vmatpush.msra.mxu0 %v1152
    %1174 = vmatpush.msra.mxu0 %v1151
    %1175 = vmatpush.msra.mxu0 %v1150
    %1176 = vmatpush.msra.mxu0 %v1149
    %1177 = vmatpush.msra.mxu0 %v1148
    %1178 = vmatpush.msra.mxu0 %v1147
    %1179 = vmatpush.msra.mxu0 %v1146
    %1180 = vmatpush.msra.mxu0 %v1145
    %1181 = vmatpush.msra.mxu0 %v1144
    %1182 = vmatpush.msra.mxu0 %v1143
    %1183 = vmatpush.msra.mxu0 %v1142
    %1184 = vmatpush.msra.mxu0 %v1141
    %1185 = vmatpush.msra.mxu0 %v1140
    %1186 = vmatpush.msra.mxu0 %v1139
    %1187 = vmatmul.f32.gmra.mxu0 %v1116
    %v1188 = vpop.f32.mrf.mxu0
    %v1189 = vadd.f32 0.0, %v1188
    %1190 = vdwg.mxu0
    %1191 = vmatpush.msra.mxu0 %v1170
    %1192 = vmatpush.msra.mxu0 %v1169
    %1193 = vmatpush.msra.mxu0 %v1168
    %1194 = vmatpush.msra.mxu0 %v1167
    %1195 = vmatpush.msra.mxu0 %v1166
    %1196 = vmatpush.msra.mxu0 %v1165
    %1197 = vmatpush.msra.mxu0 %v1164
    %1198 = vmatpush.msra.mxu0 %v1163
    %1199 = vmatpush.msra.mxu0 %v1162
    %1200 = vmatpush.msra.mxu0 %v1161
    %1201 = vmatpush.msra.mxu0 %v1160
    %1202 = vmatpush.msra.mxu0 %v1159
    %1203 = vmatpush.msra.mxu0 %v1158
    %1204 = vmatpush.msra.mxu0 %v1157
    %1205 = vmatpush.msra.mxu0 %v1156
    %1206 = vmatpush.msra.mxu0 %v1155
    %1207 = vmatmul.f32.gmra.mxu0 %v1136
    %v1208 = vpop.f32.mrf.mxu0
    %v1209 = vadd.f32 %v1189, %v1208
    %1210 = vdwg.mxu0
    %v1211 = vadd.f32 %v1092, %v1209
    %s1212 = scalar_lea.vmem %s7, 12
    %v1213 = vld [vmem:[%s1212] sm:$0x3]
    %v1215 = vsel %vm44, %v1213, 0
    %1217 = vmatpush.msra.mxu0 0.0
    %1218 = vmatpush.msra.mxu0 0.0
    %1219 = vmatpush.msra.mxu0 0.0
    %1220 = vmatpush.msra.mxu0 0.0
    %1221 = vmatpush.msra.mxu0 0.0
    %1222 = vmatpush.msra.mxu0 0.0
    %1223 = vmatpush.msra.mxu0 0.0
    %1224 = vmatpush.msra.mxu0 0.0
    %1225 = vmatpush.msra.mxu0 0.0
    %1226 = vmatpush.msra.mxu0 0.0
    %1227 = vmatpush.msra.mxu0 0.0
    %1228 = vmatpush.msra.mxu0 0.0
    %1229 = vmatpush.msra.mxu0 0.0
    %1230 = vmatpush.msra.mxu0 0.0
    %1231 = vmatpush.msra.mxu0 %v500
    %1232 = vmatpush.msra.mxu0 %v498
    %1233 = vmatmul.f32.gmra.mxu0 %v1215
    %v1234 = vpop.f32.mrf.mxu0
    %v1235 = vadd.f32 0.0, %v1234
    %1236 = vdwg.mxu0
    %1237 = vmatpush.msra.mxu0 0.0
    %1238 = vmatpush.msra.mxu0 0.0
    %1239 = vmatpush.msra.mxu0 0.0
    %1240 = vmatpush.msra.mxu0 0.0
    %1241 = vmatpush.msra.mxu0 0.0
    %1242 = vmatpush.msra.mxu0 0.0
    %1243 = vmatpush.msra.mxu0 0.0
    %1244 = vmatpush.msra.mxu0 0.0
    %1245 = vmatpush.msra.mxu0 0.0
    %1246 = vmatpush.msra.mxu0 0.0
    %1247 = vmatpush.msra.mxu0 0.0
    %1248 = vmatpush.msra.mxu0 0.0
    %1249 = vmatpush.msra.mxu0 0.0
    %1250 = vmatpush.msra.mxu0 0.0
    %1251 = vmatpush.msra.mxu0 %v501
    %1252 = vmatpush.msra.mxu0 %v499
    %1253 = vmatmul.f32.gmra.mxu0 %v1215
    %v1254 = vpop.f32.mrf.mxu0
    %v1255 = vadd.f32 0.0, %v1254
    %1256 = vdwg.mxu0
    %s1257 = scalar_lea.vmem %s6, 1536
    %v1258 = vld [vmem:[%s1257] sm:$0xff]
    %v1259 = vld [vmem:[%s1257 + $0x8] sm:$0xff]
    %v1260 = vld [vmem:[%s1257 + $0x10] sm:$0xff]
    %v1261 = vld [vmem:[%s1257 + $0x18] sm:$0xff]
    %v1262 = vld [vmem:[%s1257 + $0x20] sm:$0xff]
    %v1263 = vld [vmem:[%s1257 + $0x28] sm:$0xff]
    %v1264 = vld [vmem:[%s1257 + $0x30] sm:$0xff]
    %v1265 = vld [vmem:[%s1257 + $0x38] sm:$0xff]
    %v1266 = vld [vmem:[%s1257 + $0x40] sm:$0xff]
    %v1267 = vld [vmem:[%s1257 + $0x48] sm:$0xff]
    %v1268 = vld [vmem:[%s1257 + $0x50] sm:$0xff]
    %v1269 = vld [vmem:[%s1257 + $0x58] sm:$0xff]
    %v1270 = vld [vmem:[%s1257 + $0x60] sm:$0xff]
    %v1271 = vld [vmem:[%s1257 + $0x68] sm:$0xff]
    %v1272 = vld [vmem:[%s1257 + $0x70] sm:$0xff]
    %v1273 = vld [vmem:[%s1257 + $0x78] sm:$0xff]
    %v1274 = vld [vmem:[%s1257 + $0x80] sm:$0xff]
    %v1275 = vld [vmem:[%s1257 + $0x88] sm:$0xff]
    %v1276 = vld [vmem:[%s1257 + $0x90] sm:$0xff]
    %v1277 = vld [vmem:[%s1257 + $0x98] sm:$0xff]
    %v1278 = vld [vmem:[%s1257 + $0xa0] sm:$0xff]
    %v1279 = vld [vmem:[%s1257 + $0xa8] sm:$0xff]
    %v1280 = vld [vmem:[%s1257 + $0xb0] sm:$0xff]
    %v1281 = vld [vmem:[%s1257 + $0xb8] sm:$0xff]
    %v1282 = vld [vmem:[%s1257 + $0xc0] sm:$0xff]
    %v1283 = vld [vmem:[%s1257 + $0xc8] sm:$0xff]
    %v1284 = vld [vmem:[%s1257 + $0xd0] sm:$0xff]
    %v1285 = vld [vmem:[%s1257 + $0xd8] sm:$0xff]
    %v1286 = vld [vmem:[%s1257 + $0xe0] sm:$0xff]
    %v1287 = vld [vmem:[%s1257 + $0xe8] sm:$0xff]
    %v1288 = vld [vmem:[%s1257 + $0xf0] sm:$0xff]
    %v1289 = vld [vmem:[%s1257 + $0xf8] sm:$0xff]
    %1290 = vmatpush.msra.mxu0 %v1273
    %1291 = vmatpush.msra.mxu0 %v1272
    %1292 = vmatpush.msra.mxu0 %v1271
    %1293 = vmatpush.msra.mxu0 %v1270
    %1294 = vmatpush.msra.mxu0 %v1269
    %1295 = vmatpush.msra.mxu0 %v1268
    %1296 = vmatpush.msra.mxu0 %v1267
    %1297 = vmatpush.msra.mxu0 %v1266
    %1298 = vmatpush.msra.mxu0 %v1265
    %1299 = vmatpush.msra.mxu0 %v1264
    %1300 = vmatpush.msra.mxu0 %v1263
    %1301 = vmatpush.msra.mxu0 %v1262
    %1302 = vmatpush.msra.mxu0 %v1261
    %1303 = vmatpush.msra.mxu0 %v1260
    %1304 = vmatpush.msra.mxu0 %v1259
    %1305 = vmatpush.msra.mxu0 %v1258
    %1306 = vmatmul.f32.gmra.mxu0 %v1235
    %v1307 = vpop.f32.mrf.mxu0
    %v1308 = vadd.f32 0.0, %v1307
    %1309 = vdwg.mxu0
    %1310 = vmatpush.msra.mxu0 %v1289
    %1311 = vmatpush.msra.mxu0 %v1288
    %1312 = vmatpush.msra.mxu0 %v1287
    %1313 = vmatpush.msra.mxu0 %v1286
    %1314 = vmatpush.msra.mxu0 %v1285
    %1315 = vmatpush.msra.mxu0 %v1284
    %1316 = vmatpush.msra.mxu0 %v1283
    %1317 = vmatpush.msra.mxu0 %v1282
    %1318 = vmatpush.msra.mxu0 %v1281
    %1319 = vmatpush.msra.mxu0 %v1280
    %1320 = vmatpush.msra.mxu0 %v1279
    %1321 = vmatpush.msra.mxu0 %v1278
    %1322 = vmatpush.msra.mxu0 %v1277
    %1323 = vmatpush.msra.mxu0 %v1276
    %1324 = vmatpush.msra.mxu0 %v1275
    %1325 = vmatpush.msra.mxu0 %v1274
    %1326 = vmatmul.f32.gmra.mxu0 %v1255
    %v1327 = vpop.f32.mrf.mxu0
    %v1328 = vadd.f32 %v1308, %v1327
    %1329 = vdwg.mxu0
    %v1330 = vadd.f32 %v1211, %v1328
    %s1331 = scalar_lea.vmem %s7, 14
    %v1332 = vld [vmem:[%s1331] sm:$0x3]
    %v1334 = vsel %vm44, %v1332, 0
    %1336 = vmatpush.msra.mxu0 0.0
    %1337 = vmatpush.msra.mxu0 0.0
    %1338 = vmatpush.msra.mxu0 0.0
    %1339 = vmatpush.msra.mxu0 0.0
    %1340 = vmatpush.msra.mxu0 0.0
    %1341 = vmatpush.msra.mxu0 0.0
    %1342 = vmatpush.msra.mxu0 0.0
    %1343 = vmatpush.msra.mxu0 0.0
    %1344 = vmatpush.msra.mxu0 0.0
    %1345 = vmatpush.msra.mxu0 0.0
    %1346 = vmatpush.msra.mxu0 0.0
    %1347 = vmatpush.msra.mxu0 0.0
    %1348 = vmatpush.msra.mxu0 0.0
    %1349 = vmatpush.msra.mxu0 0.0
    %1350 = vmatpush.msra.mxu0 %v500
    %1351 = vmatpush.msra.mxu0 %v498
    %1352 = vmatmul.f32.gmra.mxu0 %v1334
    %v1353 = vpop.f32.mrf.mxu0
    %v1354 = vadd.f32 0.0, %v1353
    %1355 = vdwg.mxu0
    %1356 = vmatpush.msra.mxu0 0.0
    %1357 = vmatpush.msra.mxu0 0.0
    %1358 = vmatpush.msra.mxu0 0.0
    %1359 = vmatpush.msra.mxu0 0.0
    %1360 = vmatpush.msra.mxu0 0.0
    %1361 = vmatpush.msra.mxu0 0.0
    %1362 = vmatpush.msra.mxu0 0.0
    %1363 = vmatpush.msra.mxu0 0.0
    %1364 = vmatpush.msra.mxu0 0.0
    %1365 = vmatpush.msra.mxu0 0.0
    %1366 = vmatpush.msra.mxu0 0.0
    %1367 = vmatpush.msra.mxu0 0.0
    %1368 = vmatpush.msra.mxu0 0.0
    %1369 = vmatpush.msra.mxu0 0.0
    %1370 = vmatpush.msra.mxu0 %v501
    %1371 = vmatpush.msra.mxu0 %v499
    %1372 = vmatmul.f32.gmra.mxu0 %v1334
    %v1373 = vpop.f32.mrf.mxu0
    %v1374 = vadd.f32 0.0, %v1373
    %1375 = vdwg.mxu0
    %s1376 = scalar_lea.vmem %s6, 1792
    %v1377 = vld [vmem:[%s1376] sm:$0xff]
    %v1378 = vld [vmem:[%s1376 + $0x8] sm:$0xff]
    %v1379 = vld [vmem:[%s1376 + $0x10] sm:$0xff]
    %v1380 = vld [vmem:[%s1376 + $0x18] sm:$0xff]
    %v1381 = vld [vmem:[%s1376 + $0x20] sm:$0xff]
    %v1382 = vld [vmem:[%s1376 + $0x28] sm:$0xff]
    %v1383 = vld [vmem:[%s1376 + $0x30] sm:$0xff]
    %v1384 = vld [vmem:[%s1376 + $0x38] sm:$0xff]
    %v1385 = vld [vmem:[%s1376 + $0x40] sm:$0xff]
    %v1386 = vld [vmem:[%s1376 + $0x48] sm:$0xff]
    %v1387 = vld [vmem:[%s1376 + $0x50] sm:$0xff]
    %v1388 = vld [vmem:[%s1376 + $0x58] sm:$0xff]
    %v1389 = vld [vmem:[%s1376 + $0x60] sm:$0xff]
    %v1390 = vld [vmem:[%s1376 + $0x68] sm:$0xff]
    %v1391 = vld [vmem:[%s1376 + $0x70] sm:$0xff]
    %v1392 = vld [vmem:[%s1376 + $0x78] sm:$0xff]
    %v1393 = vld [vmem:[%s1376 + $0x80] sm:$0xff]
    %v1394 = vld [vmem:[%s1376 + $0x88] sm:$0xff]
    %v1395 = vld [vmem:[%s1376 + $0x90] sm:$0xff]
    %v1396 = vld [vmem:[%s1376 + $0x98] sm:$0xff]
    %v1397 = vld [vmem:[%s1376 + $0xa0] sm:$0xff]
    %v1398 = vld [vmem:[%s1376 + $0xa8] sm:$0xff]
    %v1399 = vld [vmem:[%s1376 + $0xb0] sm:$0xff]
    %v1400 = vld [vmem:[%s1376 + $0xb8] sm:$0xff]
    %v1401 = vld [vmem:[%s1376 + $0xc0] sm:$0xff]
    %v1402 = vld [vmem:[%s1376 + $0xc8] sm:$0xff]
    %v1403 = vld [vmem:[%s1376 + $0xd0] sm:$0xff]
    %v1404 = vld [vmem:[%s1376 + $0xd8] sm:$0xff]
    %v1405 = vld [vmem:[%s1376 + $0xe0] sm:$0xff]
    %v1406 = vld [vmem:[%s1376 + $0xe8] sm:$0xff]
    %v1407 = vld [vmem:[%s1376 + $0xf0] sm:$0xff]
    %v1408 = vld [vmem:[%s1376 + $0xf8] sm:$0xff]
    %1409 = vmatpush.msra.mxu0 %v1392
    %1410 = vmatpush.msra.mxu0 %v1391
    %1411 = vmatpush.msra.mxu0 %v1390
    %1412 = vmatpush.msra.mxu0 %v1389
    %1413 = vmatpush.msra.mxu0 %v1388
    %1414 = vmatpush.msra.mxu0 %v1387
    %1415 = vmatpush.msra.mxu0 %v1386
    %1416 = vmatpush.msra.mxu0 %v1385
    %1417 = vmatpush.msra.mxu0 %v1384
    %1418 = vmatpush.msra.mxu0 %v1383
    %1419 = vmatpush.msra.mxu0 %v1382
    %1420 = vmatpush.msra.mxu0 %v1381
    %1421 = vmatpush.msra.mxu0 %v1380
    %1422 = vmatpush.msra.mxu0 %v1379
    %1423 = vmatpush.msra.mxu0 %v1378
    %1424 = vmatpush.msra.mxu0 %v1377
    %1425 = vmatmul.f32.gmra.mxu0 %v1354
    %v1426 = vpop.f32.mrf.mxu0
    %v1427 = vadd.f32 0.0, %v1426
    %1428 = vdwg.mxu0
    %1429 = vmatpush.msra.mxu0 %v1408
    %1430 = vmatpush.msra.mxu0 %v1407
    %1431 = vmatpush.msra.mxu0 %v1406
    %1432 = vmatpush.msra.mxu0 %v1405
    %1433 = vmatpush.msra.mxu0 %v1404
    %1434 = vmatpush.msra.mxu0 %v1403
    %1435 = vmatpush.msra.mxu0 %v1402
    %1436 = vmatpush.msra.mxu0 %v1401
    %1437 = vmatpush.msra.mxu0 %v1400
    %1438 = vmatpush.msra.mxu0 %v1399
    %1439 = vmatpush.msra.mxu0 %v1398
    %1440 = vmatpush.msra.mxu0 %v1397
    %1441 = vmatpush.msra.mxu0 %v1396
    %1442 = vmatpush.msra.mxu0 %v1395
    %1443 = vmatpush.msra.mxu0 %v1394
    %1444 = vmatpush.msra.mxu0 %v1393
    %1445 = vmatmul.f32.gmra.mxu0 %v1374
    %v1446 = vpop.f32.mrf.mxu0
    %v1447 = vadd.f32 %v1427, %v1446
    %1448 = vdwg.mxu0
    %v1449 = vadd.f32 %v1330, %v1447
    %v1450 = vld [vmem:[%s8] sm:$0x1]
    %v1452 = vperm.slane %v1450, 0
    %v1454 = vadd.f32 %v1449, %v1452
    %vm1455 = vcmask 74752
    %1456 = vst.msk [vmem:[#allocation2] sm:$0x3] %vm1455, %v1454
    // Predicated region
    $region38: #{simple_model_forward.1} parent=1 // pred_check
      _
    $region39: #{simple_model_forward.1} parent=1 // pred_check_branch
      %1458 = sbr.rel (0) target = $region41
    $region40: #{simple_model_forward.1} parent=1 // pred_region
      %1460 = vsyncadd [#allocation3], 0
      %s1462 = sshll.u32 [#allocation2], 4
      %s1463 = int_to_ptr.vmem [resolvable:$true] %s1462
      %s1464 = sshll.u32 %s9, 4
      %s1465 = int_to_ptr.hbm [resolvable:$true] %s1464
      %1467 = dma.vmem_to_hbm [thread:$0]  %s1463, 32, %s1465, [#allocation3]
    $region41: #{simple_model_forward.1} parent=1 // pred_fallthru
      _
    // Predicated region
    $region42: #{simple_model_forward.1} parent=1 // pred_check
      _
    $region43: #{simple_model_forward.1} parent=1 // pred_check_branch
      %1469 = sbr.rel (0) target = $region45
    $region44: #{simple_model_forward.1} parent=1 // pred_region
      %1471 = dma.done [#allocation3], 32
    $region45: #{simple_model_forward.1} parent=1 // pred_fallthru
      _
    %1472 = vsyncpa [#allocation3], 1

</llo_original>
